<compile_context>
chip_gen: v6e
topology: v6e:2x2x1
jax: 0.10.0
libtpu: 0.0.40
codegen_flags: <defaults>
</compile_context>

<pallas_src>
import functools

import jax
import jax.numpy as jnp
from jax import lax
from jax.experimental import pallas as pl
from jax.experimental.pallas import tpu as pltpu


# ----------------------------------------------------------------------------
# Fused kernel: per grid step (b, s) gather TS word rows from HBM (double
# buffered across steps), add token-type + positional embeddings, LayerNorm
# over H, store a lane-dense (1, TS, H) slab.
# ----------------------------------------------------------------------------
def _emb_layernorm_kernel(
    ids_ref,                       # SMEM scalar prefetch: (B*S,) int32 token ids
    pos_ref,                       # VMEM (TS, H)     positional embedding slab
    tt_ids_ref,                    # VMEM (1, TS, 1)  int32 token-type ids
    ttab_ref,                      # VMEM (T, H)      token-type table (resident)
    gamma_ref, beta_ref,           # VMEM (1, H)      LayerNorm affine params
    word_hbm,                      # HBM  (V, H)      word table (pl.ANY, native dtype)
    o_ref,                         # out  (1, TS, H)
    wbuf,                          # VMEM (2*TS, H)   gathered word rows (2 slots)
    sem,                           # DMA semaphores (2,)
    *, eps):
    b = pl.program_id(0)
    s = pl.program_id(1)
    nst = pl.num_programs(1)
    ts = pos_ref.shape[0]
    base = (b * nst + s) * ts      # flat index of the first token of this tile
    slot = s & 1
    unroll = 8 if ts % 8 == 0 else 1

    def issue_tile(tile_base, dst_slot):
        # Gather `ts` word-embedding rows into slot `dst_slot`.  Every copy
        # signals the same DMA semaphore, so one wait for ts*H*itemsize bytes
        # covers the whole tile.
        dst_base = dst_slot * ts

        def body(j, carry):
            r0 = pl.multiple_of(j * unroll, unroll)
            for u in range(unroll):              # unrolled descriptor pushes
                r = r0 + u
                tok = ids_ref[tile_base + r]
                pltpu.make_async_copy(
                    word_hbm.at[pl.ds(tok, 1), :],
                    wbuf.at[pl.ds(dst_base + r, 1), :],
                    sem.at[dst_slot],
                ).start()
            return carry

        lax.fori_loop(0, ts // unroll, body, 0)

    # Prime the pipeline on the first sequence tile of each batch row (each
    # megacore shard starts at s == 0 since only the batch axis is parallel).
    @pl.when(s == 0)
    def _():
        issue_tile(base, slot)

    # Prefetch the next sequence tile's rows (same batch row) into the other
    # slot so the HBM gather latency overlaps this tile's LN + writeback.
    @pl.when(s + 1 < nst)
    def _():
        issue_tile(base + ts, 1 - slot)

    # Token-type + positional contribution from VMEM-resident inputs; computed
    # before the DMA wait so it overlaps the (only partially hidden) first-tile
    # gather latency.  T is tiny (usually 2) -> plain VPU selects.
    pre = pos_ref[...].astype(jnp.float32)                       # (ts, H)
    tt = tt_ids_ref[0]                                           # (ts, 1) int32
    ttab_f = ttab_ref[...].astype(jnp.float32)                   # (T, H)
    for t_idx in range(ttab_f.shape[0]):
        sel = (tt == t_idx).astype(jnp.float32)                  # (ts, 1)
        pre = pre + sel * ttab_f[t_idx:t_idx + 1, :]             # -> (ts, H)

    # One wait for all `ts` row copies of the current tile (DMA semaphores
    # count bytes; this (ts, H) descriptor matches the aggregate).
    row_off = pl.multiple_of(slot * ts, ts)
    cur = wbuf.at[pl.ds(row_off, ts), :]
    pltpu.make_async_copy(cur, cur, sem.at[slot]).wait()

    e = wbuf[pl.ds(row_off, ts), :].astype(jnp.float32) + pre    # (ts, H)

    # LayerNorm over H in f32 (biased variance, like torch.nn.LayerNorm).
    mean = jnp.mean(e, axis=-1, keepdims=True)
    cent = e - mean
    var = jnp.mean(cent * cent, axis=-1, keepdims=True)
    y = (cent * lax.rsqrt(var + eps) * gamma_ref[...].astype(jnp.float32)
         + beta_ref[...].astype(jnp.float32))

    o_ref[0] = y.astype(o_ref.dtype)      # dropout: identity in eval mode


# ----------------------------------------------------------------------------
# Wrapper: standard QBertEmbeddings path (input_ids given, absolute positions).
# ----------------------------------------------------------------------------
def qbert_embeddings(input_ids, params, token_type_ids=None,
                     past_key_values_length=0, *, eps=1e-12, seq_tile=None):
    # TODO(synk): inputs_embeds / user-supplied position_ids code paths are not
    # implemented; past_key_values_length must be a static Python int.
    B, S = input_ids.shape
    word = params["word_embeddings"]          # (V, H), kept in native dtype
    pos = params["position_embeddings"]       # (P, H)
    ttab = params["token_type_embeddings"]    # (T, H)
    gamma = params["ln_gamma"]                # (H,)
    beta = params["ln_beta"]                  # (H,)
    V, H = word.shape
    T = ttab.shape[0]

    if token_type_ids is None:
        token_type_ids = jnp.zeros((B, S), jnp.int32)

    # Absolute positions: arange(past, past+S) -> static slice of the table.
    pos_slice = pos[past_key_values_length:past_key_values_length + S]   # (S, H)

    # Sequence tile: go as large as possible (VMEM footprint is tiny).
    if seq_tile is None:
        if S <= 512:
            seq_tile = S
        else:
            seq_tile = S
            for cand in (512, 256, 128, 64, 32, 16, 8):
                if S % cand == 0:
                    seq_tile = cand
                    break
    TS = seq_tile
    assert S % TS == 0, "seq_tile must divide the sequence length"
    if TS != S:
        assert TS % 8 == 0, "seq_tile must be a multiple of 8 (or the full seq)"
    nst = S // TS

    # Clamp ids: an out-of-range id would otherwise be an unchecked OOB HBM DMA.
    ids_flat = jnp.clip(input_ids.reshape(B * S).astype(jnp.int32), 0, V - 1)
    tt_ids = jnp.clip(token_type_ids.astype(jnp.int32), 0, T - 1).reshape(B, S, 1)

    kernel = functools.partial(_emb_layernorm_kernel, eps=float(eps))

    return pl.pallas_call(
        kernel,
        out_shape=jax.ShapeDtypeStruct((B, S, H), word.dtype),
        grid_spec=pltpu.PrefetchScalarGridSpec(
            num_scalar_prefetch=1,
            grid=(B, nst),
            in_specs=[
                # positional embedding slab for this sequence tile
                pl.BlockSpec((TS, H), lambda b, s, ids: (s, 0)),
                # token-type ids for this tile (int32, VMEM)
                pl.BlockSpec((1, TS, 1), lambda b, s, ids: (b, s, 0)),
                # token-type table: tiny, fully resident in VMEM
                pl.BlockSpec((T, H), lambda b, s, ids: (0, 0)),
                # LayerNorm gamma / beta (full, resident)
                pl.BlockSpec((1, H), lambda b, s, ids: (0, 0)),
                pl.BlockSpec((1, H), lambda b, s, ids: (0, 0)),
                # word embedding table stays in HBM; rows gathered via DMA
                pl.BlockSpec(memory_space=pl.ANY),
            ],
            out_specs=pl.BlockSpec((1, TS, H), lambda b, s, ids: (b, s, 0)),
            scratch_shapes=[
                pltpu.VMEM((2 * TS, H), word.dtype),   # double-buffered word rows
                pltpu.SemaphoreType.DMA((2,)),         # one sem per slot
            ],
        ),
        compiler_params=pltpu.CompilerParams(
            dimension_semantics=("parallel", "arbitrary"),
            vmem_limit_bytes=32 * 1024 * 1024,
        ),
    )(
        ids_flat,                     # scalar-prefetch (SMEM)
        pos_slice,
        tt_ids,
        ttab,
        gamma.reshape(1, H),
        beta.reshape(1, H),
        word,                         # native dtype, no reshape / astype copy
    )


# ----------------------------------------------------------------------------
# Pure-JAX reference (mirrors the PyTorch module forward exactly, eval mode)
# ----------------------------------------------------------------------------
def reference_embeddings(input_ids, params, token_type_ids=None,
                         past_key_values_length=0, eps=1e-12):
    B, S = input_ids.shape
    word = params["word_embeddings"]
    pos = params["position_embeddings"]
    ttab = params["token_type_embeddings"]
    gamma = params["ln_gamma"]
    beta = params["ln_beta"]
    if token_type_ids is None:
        token_type_ids = jnp.zeros((B, S), jnp.int32)

    e = (word[input_ids]
         + ttab[token_type_ids]
         + pos[past_key_values_length:past_key_values_length + S][None, :, :])
    mean = e.mean(-1, keepdims=True)
    var = ((e - mean) ** 2).mean(-1, keepdims=True)
    return (e - mean) * lax.rsqrt(var + eps) * gamma + beta


if __name__ == "__main__":
    # Small deterministic config: batch=2, seq=8, hidden=32.
    B, S, H = 2, 8, 32
    vocab_size, max_pos, type_vocab = 64, 16, 2
    pad_token_id = 0
    eps = 1e-12

    key = jax.random.PRNGKey(0)
    k_ids, k_tt, k_w, k_p, k_t, k_g, k_b = jax.random.split(key, 7)

    input_ids = jax.random.randint(k_ids, (B, S), 0, vocab_size, dtype=jnp.int32)
    token_type_ids = jax.random.randint(k_tt, (B, S), 0, type_vocab, dtype=jnp.int32)

    word = 0.02 * jax.random.normal(k_w, (vocab_size, H), jnp.float32)
    word = word.at[pad_token_id].set(0.0)      # nn.Embedding padding_idx row
    pos = 0.02 * jax.random.normal(k_p, (max_pos, H), jnp.float32)
    ttab = 0.02 * jax.random.normal(k_t, (type_vocab, H), jnp.float32)
    gamma = 1.0 + 0.1 * jax.random.normal(k_g, (H,), jnp.float32)
    beta = 0.1 * jax.random.normal(k_b, (H,), jnp.float32)

    params = {
        "word_embeddings": word,
        "position_embeddings": pos,
        "token_type_embeddings": ttab,
        "ln_gamma": gamma,
        "ln_beta": beta,
    }

    out = qbert_embeddings(input_ids, params, token_type_ids, eps=eps)
    out = jax.block_until_ready(out)

    ref = reference_embeddings(input_ids, params, token_type_ids, eps=eps)
    assert out.shape == (B, S, H)
    max_err = jnp.max(jnp.abs(out - ref))
    assert jnp.allclose(out, ref, rtol=1e-5, atol=1e-5), f"max err {max_err}"

    print("KERNEL_OK")
</pallas_src>

<mosaic_0001>
module attributes {stable_mosaic.version = 11 : i64} {
  func.func @_emb_layernorm_kernel(%arg0: i32, %arg1: i32, %arg2: memref<16xi32, #tpu.memory_space<smem>>, %arg3: memref<8x32xf32, #tpu.memory_space<vmem>>, %arg4: memref<1x8x1xi32, #tpu.memory_space<vmem>>, %arg5: memref<2x32xf32, #tpu.memory_space<vmem>>, %arg6: memref<1x32xf32, #tpu.memory_space<vmem>>, %arg7: memref<1x32xf32, #tpu.memory_space<vmem>>, %arg8: memref<64x32xf32, #tpu.memory_space<any>>, %arg9: memref<1x8x32xf32, #tpu.memory_space<vmem>>, %arg10: memref<16x32xf32, #tpu.memory_space<vmem>>, %arg11: memref<2x!tpu.dma_semaphore, #tpu.memory_space<semaphore_mem>>) attributes {dimension_semantics = [#tpu.dimension_semantics<parallel>, #tpu.dimension_semantics<arbitrary>], iteration_bounds = array<i64: 2, 1>, scalar_prefetch = 1 : i64, scratch_operands = 2 : i64, tpu.core_type = #tpu.core_type<tc>, window_params = [{transform_indices = @transform_0, window_bounds = array<i64: 8, 32>}, {transform_indices = @transform_1, window_bounds = array<i64: 1, 8, 1>}, {pipeline_mode = #tpu.pipeline_mode<synchronous>, transform_indices = @transform_2, window_bounds = array<i64: 2, 32>}, {pipeline_mode = #tpu.pipeline_mode<synchronous>, transform_indices = @transform_3, window_bounds = array<i64: 1, 32>}, {pipeline_mode = #tpu.pipeline_mode<synchronous>, transform_indices = @transform_4, window_bounds = array<i64: 1, 32>}, {}, {transform_indices = @transform_6, window_bounds = array<i64: 1, 8, 32>}]} {
    %c1_i32 = arith.constant 1 : i32
    %0 = arith.muli %arg0, %c1_i32 : i32
    %1 = arith.addi %0, %arg1 : i32
    %c8_i32 = arith.constant 8 : i32
    %2 = arith.muli %1, %c8_i32 : i32
    %c1_i32_0 = arith.constant 1 : i32
    %3 = arith.andi %arg1, %c1_i32_0 : i32
    %c0_i32 = arith.constant 0 : i32
    %4 = arith.cmpi eq, %arg1, %c0_i32 : i32
    %5 = arith.extui %4 : i1 to i32
    %c0_i32_1 = arith.constant 0 : i32
    %6 = arith.cmpi ne, %5, %c0_i32_1 : i32
    scf.if %6 {
      %c8_i32_28 = arith.constant 8 : i32
      %67 = arith.muli %3, %c8_i32_28 : i32
      %c0_i32_29 = arith.constant 0 : i32
      %c8_i32_30 = arith.constant 8 : i32
      %68 = arith.muli %c0_i32_29, %c8_i32_30 : i32
      %69 = tpu.assume_multiple %68, 8 : i32
      %c0_i32_31 = arith.constant 0 : i32
      %70 = arith.addi %69, %c0_i32_31 : i32
      %71 = arith.addi %2, %70 : i32
      %72 = arith.index_cast %71 : i32 to index
      %73 = memref.load %arg2[%72] : memref<16xi32, #tpu.memory_space<smem>>
      %74 = arith.addi %67, %70 : i32
      %c0_i32_32 = arith.constant 0 : i32
      %75 = tpu.memref_slice %arg8[%73, %c0_i32_32] : memref<64x32xf32, #tpu.memory_space<any>> -> memref<1x32xf32, #tpu.memory_space<any>>
      %c0_i32_33 = arith.constant 0 : i32
      %76 = tpu.memref_slice %arg10[%74, %c0_i32_33] : memref<16x32xf32, #tpu.memory_space<vmem>> -> memref<1x32xf32, #tpu.memory_space<vmem>>
      %77 = tpu.memref_slice %arg11[%3] : memref<2x!tpu.dma_semaphore, #tpu.memory_space<semaphore_mem>> -> memref<1x!tpu.dma_semaphore, #tpu.memory_space<semaphore_mem>>
      %78 = tpu.memref_squeeze %77 : memref<1x!tpu.dma_semaphore, #tpu.memory_space<semaphore_mem>> -> memref<!tpu.dma_semaphore, #tpu.memory_space<semaphore_mem>>
      tpu.enqueue_dma source(%75 : memref<1x32xf32, #tpu.memory_space<any>>) target(%76 : memref<1x32xf32, #tpu.memory_space<vmem>>) target_semaphore(%78 : memref<!tpu.dma_semaphore, #tpu.memory_space<semaphore_mem>>)
      %c1_i32_34 = arith.constant 1 : i32
      %79 = arith.addi %69, %c1_i32_34 : i32
      %80 = arith.addi %2, %79 : i32
      %81 = arith.index_cast %80 : i32 to index
      %82 = memref.load %arg2[%81] : memref<16xi32, #tpu.memory_space<smem>>
      %83 = arith.addi %67, %79 : i32
      %c0_i32_35 = arith.constant 0 : i32
      %84 = tpu.memref_slice %arg8[%82, %c0_i32_35] : memref<64x32xf32, #tpu.memory_space<any>> -> memref<1x32xf32, #tpu.memory_space<any>>
      %c0_i32_36 = arith.constant 0 : i32
      %85 = tpu.memref_slice %arg10[%83, %c0_i32_36] : memref<16x32xf32, #tpu.memory_space<vmem>> -> memref<1x32xf32, #tpu.memory_space<vmem>>
      %86 = tpu.memref_slice %arg11[%3] : memref<2x!tpu.dma_semaphore, #tpu.memory_space<semaphore_mem>> -> memref<1x!tpu.dma_semaphore, #tpu.memory_space<semaphore_mem>>
      %87 = tpu.memref_squeeze %86 : memref<1x!tpu.dma_semaphore, #tpu.memory_space<semaphore_mem>> -> memref<!tpu.dma_semaphore, #tpu.memory_space<semaphore_mem>>
      tpu.enqueue_dma source(%84 : memref<1x32xf32, #tpu.memory_space<any>>) target(%85 : memref<1x32xf32, #tpu.memory_space<vmem>>) target_semaphore(%87 : memref<!tpu.dma_semaphore, #tpu.memory_space<semaphore_mem>>)
      %c2_i32 = arith.constant 2 : i32
      %88 = arith.addi %69, %c2_i32 : i32
      %89 = arith.addi %2, %88 : i32
      %90 = arith.index_cast %89 : i32 to index
      %91 = memref.load %arg2[%90] : memref<16xi32, #tpu.memory_space<smem>>
      %92 = arith.addi %67, %88 : i32
      %c0_i32_37 = arith.constant 0 : i32
      %93 = tpu.memref_slice %arg8[%91, %c0_i32_37] : memref<64x32xf32, #tpu.memory_space<any>> -> memref<1x32xf32, #tpu.memory_space<any>>
      %c0_i32_38 = arith.constant 0 : i32
      %94 = tpu.memref_slice %arg10[%92, %c0_i32_38] : memref<16x32xf32, #tpu.memory_space<vmem>> -> memref<1x32xf32, #tpu.memory_space<vmem>>
      %95 = tpu.memref_slice %arg11[%3] : memref<2x!tpu.dma_semaphore, #tpu.memory_space<semaphore_mem>> -> memref<1x!tpu.dma_semaphore, #tpu.memory_space<semaphore_mem>>
      %96 = tpu.memref_squeeze %95 : memref<1x!tpu.dma_semaphore, #tpu.memory_space<semaphore_mem>> -> memref<!tpu.dma_semaphore, #tpu.memory_space<semaphore_mem>>
      tpu.enqueue_dma source(%93 : memref<1x32xf32, #tpu.memory_space<any>>) target(%94 : memref<1x32xf32, #tpu.memory_space<vmem>>) target_semaphore(%96 : memref<!tpu.dma_semaphore, #tpu.memory_space<semaphore_mem>>)
      %c3_i32 = arith.constant 3 : i32
      %97 = arith.addi %69, %c3_i32 : i32
      %98 = arith.addi %2, %97 : i32
      %99 = arith.index_cast %98 : i32 to index
      %100 = memref.load %arg2[%99] : memref<16xi32, #tpu.memory_space<smem>>
      %101 = arith.addi %67, %97 : i32
      %c0_i32_39 = arith.constant 0 : i32
      %102 = tpu.memref_slice %arg8[%100, %c0_i32_39] : memref<64x32xf32, #tpu.memory_space<any>> -> memref<1x32xf32, #tpu.memory_space<any>>
      %c0_i32_40 = arith.constant 0 : i32
      %103 = tpu.memref_slice %arg10[%101, %c0_i32_40] : memref<16x32xf32, #tpu.memory_space<vmem>> -> memref<1x32xf32, #tpu.memory_space<vmem>>
      %104 = tpu.memref_slice %arg11[%3] : memref<2x!tpu.dma_semaphore, #tpu.memory_space<semaphore_mem>> -> memref<1x!tpu.dma_semaphore, #tpu.memory_space<semaphore_mem>>
      %105 = tpu.memref_squeeze %104 : memref<1x!tpu.dma_semaphore, #tpu.memory_space<semaphore_mem>> -> memref<!tpu.dma_semaphore, #tpu.memory_space<semaphore_mem>>
      tpu.enqueue_dma source(%102 : memref<1x32xf32, #tpu.memory_space<any>>) target(%103 : memref<1x32xf32, #tpu.memory_space<vmem>>) target_semaphore(%105 : memref<!tpu.dma_semaphore, #tpu.memory_space<semaphore_mem>>)
      %c4_i32 = arith.constant 4 : i32
      %106 = arith.addi %69, %c4_i32 : i32
      %107 = arith.addi %2, %106 : i32
      %108 = arith.index_cast %107 : i32 to index
      %109 = memref.load %arg2[%108] : memref<16xi32, #tpu.memory_space<smem>>
      %110 = arith.addi %67, %106 : i32
      %c0_i32_41 = arith.constant 0 : i32
      %111 = tpu.memref_slice %arg8[%109, %c0_i32_41] : memref<64x32xf32, #tpu.memory_space<any>> -> memref<1x32xf32, #tpu.memory_space<any>>
      %c0_i32_42 = arith.constant 0 : i32
      %112 = tpu.memref_slice %arg10[%110, %c0_i32_42] : memref<16x32xf32, #tpu.memory_space<vmem>> -> memref<1x32xf32, #tpu.memory_space<vmem>>
      %113 = tpu.memref_slice %arg11[%3] : memref<2x!tpu.dma_semaphore, #tpu.memory_space<semaphore_mem>> -> memref<1x!tpu.dma_semaphore, #tpu.memory_space<semaphore_mem>>
      %114 = tpu.memref_squeeze %113 : memref<1x!tpu.dma_semaphore, #tpu.memory_space<semaphore_mem>> -> memref<!tpu.dma_semaphore, #tpu.memory_space<semaphore_mem>>
      tpu.enqueue_dma source(%111 : memref<1x32xf32, #tpu.memory_space<any>>) target(%112 : memref<1x32xf32, #tpu.memory_space<vmem>>) target_semaphore(%114 : memref<!tpu.dma_semaphore, #tpu.memory_space<semaphore_mem>>)
      %c5_i32 = arith.constant 5 : i32
      %115 = arith.addi %69, %c5_i32 : i32
      %116 = arith.addi %2, %115 : i32
      %117 = arith.index_cast %116 : i32 to index
      %118 = memref.load %arg2[%117] : memref<16xi32, #tpu.memory_space<smem>>
      %119 = arith.addi %67, %115 : i32
      %c0_i32_43 = arith.constant 0 : i32
      %120 = tpu.memref_slice %arg8[%118, %c0_i32_43] : memref<64x32xf32, #tpu.memory_space<any>> -> memref<1x32xf32, #tpu.memory_space<any>>
      %c0_i32_44 = arith.constant 0 : i32
      %121 = tpu.memref_slice %arg10[%119, %c0_i32_44] : memref<16x32xf32, #tpu.memory_space<vmem>> -> memref<1x32xf32, #tpu.memory_space<vmem>>
      %122 = tpu.memref_slice %arg11[%3] : memref<2x!tpu.dma_semaphore, #tpu.memory_space<semaphore_mem>> -> memref<1x!tpu.dma_semaphore, #tpu.memory_space<semaphore_mem>>
      %123 = tpu.memref_squeeze %122 : memref<1x!tpu.dma_semaphore, #tpu.memory_space<semaphore_mem>> -> memref<!tpu.dma_semaphore, #tpu.memory_space<semaphore_mem>>
      tpu.enqueue_dma source(%120 : memref<1x32xf32, #tpu.memory_space<any>>) target(%121 : memref<1x32xf32, #tpu.memory_space<vmem>>) target_semaphore(%123 : memref<!tpu.dma_semaphore, #tpu.memory_space<semaphore_mem>>)
      %c6_i32 = arith.constant 6 : i32
      %124 = arith.addi %69, %c6_i32 : i32
      %125 = arith.addi %2, %124 : i32
      %126 = arith.index_cast %125 : i32 to index
      %127 = memref.load %arg2[%126] : memref<16xi32, #tpu.memory_space<smem>>
      %128 = arith.addi %67, %124 : i32
      %c0_i32_45 = arith.constant 0 : i32
      %129 = tpu.memref_slice %arg8[%127, %c0_i32_45] : memref<64x32xf32, #tpu.memory_space<any>> -> memref<1x32xf32, #tpu.memory_space<any>>
      %c0_i32_46 = arith.constant 0 : i32
      %130 = tpu.memref_slice %arg10[%128, %c0_i32_46] : memref<16x32xf32, #tpu.memory_space<vmem>> -> memref<1x32xf32, #tpu.memory_space<vmem>>
      %131 = tpu.memref_slice %arg11[%3] : memref<2x!tpu.dma_semaphore, #tpu.memory_space<semaphore_mem>> -> memref<1x!tpu.dma_semaphore, #tpu.memory_space<semaphore_mem>>
      %132 = tpu.memref_squeeze %131 : memref<1x!tpu.dma_semaphore, #tpu.memory_space<semaphore_mem>> -> memref<!tpu.dma_semaphore, #tpu.memory_space<semaphore_mem>>
      tpu.enqueue_dma source(%129 : memref<1x32xf32, #tpu.memory_space<any>>) target(%130 : memref<1x32xf32, #tpu.memory_space<vmem>>) target_semaphore(%132 : memref<!tpu.dma_semaphore, #tpu.memory_space<semaphore_mem>>)
      %c7_i32 = arith.constant 7 : i32
      %133 = arith.addi %69, %c7_i32 : i32
      %134 = arith.addi %2, %133 : i32
      %135 = arith.index_cast %134 : i32 to index
      %136 = memref.load %arg2[%135] : memref<16xi32, #tpu.memory_space<smem>>
      %137 = arith.addi %67, %133 : i32
      %c0_i32_47 = arith.constant 0 : i32
      %138 = tpu.memref_slice %arg8[%136, %c0_i32_47] : memref<64x32xf32, #tpu.memory_space<any>> -> memref<1x32xf32, #tpu.memory_space<any>>
      %c0_i32_48 = arith.constant 0 : i32
      %139 = tpu.memref_slice %arg10[%137, %c0_i32_48] : memref<16x32xf32, #tpu.memory_space<vmem>> -> memref<1x32xf32, #tpu.memory_space<vmem>>
      %140 = tpu.memref_slice %arg11[%3] : memref<2x!tpu.dma_semaphore, #tpu.memory_space<semaphore_mem>> -> memref<1x!tpu.dma_semaphore, #tpu.memory_space<semaphore_mem>>
      %141 = tpu.memref_squeeze %140 : memref<1x!tpu.dma_semaphore, #tpu.memory_space<semaphore_mem>> -> memref<!tpu.dma_semaphore, #tpu.memory_space<semaphore_mem>>
      tpu.enqueue_dma source(%138 : memref<1x32xf32, #tpu.memory_space<any>>) target(%139 : memref<1x32xf32, #tpu.memory_space<vmem>>) target_semaphore(%141 : memref<!tpu.dma_semaphore, #tpu.memory_space<semaphore_mem>>)
      %c1_i32_49 = arith.constant 1 : i32
    } else {
    }
    %c1_i32_2 = arith.constant 1 : i32
    %7 = arith.addi %arg1, %c1_i32_2 : i32
    %c1_i32_3 = arith.constant 1 : i32
    %8 = arith.cmpi slt, %7, %c1_i32_3 : i32
    %9 = arith.extui %8 : i1 to i32
    %c0_i32_4 = arith.constant 0 : i32
    %10 = arith.cmpi ne, %9, %c0_i32_4 : i32
    scf.if %10 {
      %c8_i32_28 = arith.constant 8 : i32
      %67 = arith.addi %2, %c8_i32_28 : i32
      %c1_i32_29 = arith.constant 1 : i32
      %68 = arith.subi %c1_i32_29, %3 : i32
      %c8_i32_30 = arith.constant 8 : i32
      %69 = arith.muli %68, %c8_i32_30 : i32
      %c0_i32_31 = arith.constant 0 : i32
      %c8_i32_32 = arith.constant 8 : i32
      %70 = arith.muli %c0_i32_31, %c8_i32_32 : i32
      %71 = tpu.assume_multiple %70, 8 : i32
      %c0_i32_33 = arith.constant 0 : i32
      %72 = arith.addi %71, %c0_i32_33 : i32
      %73 = arith.addi %67, %72 : i32
      %74 = arith.index_cast %73 : i32 to index
      %75 = memref.load %arg2[%74] : memref<16xi32, #tpu.memory_space<smem>>
      %76 = arith.addi %69, %72 : i32
      %c0_i32_34 = arith.constant 0 : i32
      %77 = tpu.memref_slice %arg8[%75, %c0_i32_34] : memref<64x32xf32, #tpu.memory_space<any>> -> memref<1x32xf32, #tpu.memory_space<any>>
      %c0_i32_35 = arith.constant 0 : i32
      %78 = tpu.memref_slice %arg10[%76, %c0_i32_35] : memref<16x32xf32, #tpu.memory_space<vmem>> -> memref<1x32xf32, #tpu.memory_space<vmem>>
      %79 = tpu.memref_slice %arg11[%68] : memref<2x!tpu.dma_semaphore, #tpu.memory_space<semaphore_mem>> -> memref<1x!tpu.dma_semaphore, #tpu.memory_space<semaphore_mem>>
      %80 = tpu.memref_squeeze %79 : memref<1x!tpu.dma_semaphore, #tpu.memory_space<semaphore_mem>> -> memref<!tpu.dma_semaphore, #tpu.memory_space<semaphore_mem>>
      tpu.enqueue_dma source(%77 : memref<1x32xf32, #tpu.memory_space<any>>) target(%78 : memref<1x32xf32, #tpu.memory_space<vmem>>) target_semaphore(%80 : memref<!tpu.dma_semaphore, #tpu.memory_space<semaphore_mem>>)
      %c1_i32_36 = arith.constant 1 : i32
      %81 = arith.addi %71, %c1_i32_36 : i32
      %82 = arith.addi %67, %81 : i32
      %83 = arith.index_cast %82 : i32 to index
      %84 = memref.load %arg2[%83] : memref<16xi32, #tpu.memory_space<smem>>
      %85 = arith.addi %69, %81 : i32
      %c0_i32_37 = arith.constant 0 : i32
      %86 = tpu.memref_slice %arg8[%84, %c0_i32_37] : memref<64x32xf32, #tpu.memory_space<any>> -> memref<1x32xf32, #tpu.memory_space<any>>
      %c0_i32_38 = arith.constant 0 : i32
      %87 = tpu.memref_slice %arg10[%85, %c0_i32_38] : memref<16x32xf32, #tpu.memory_space<vmem>> -> memref<1x32xf32, #tpu.memory_space<vmem>>
      %88 = tpu.memref_slice %arg11[%68] : memref<2x!tpu.dma_semaphore, #tpu.memory_space<semaphore_mem>> -> memref<1x!tpu.dma_semaphore, #tpu.memory_space<semaphore_mem>>
      %89 = tpu.memref_squeeze %88 : memref<1x!tpu.dma_semaphore, #tpu.memory_space<semaphore_mem>> -> memref<!tpu.dma_semaphore, #tpu.memory_space<semaphore_mem>>
      tpu.enqueue_dma source(%86 : memref<1x32xf32, #tpu.memory_space<any>>) target(%87 : memref<1x32xf32, #tpu.memory_space<vmem>>) target_semaphore(%89 : memref<!tpu.dma_semaphore, #tpu.memory_space<semaphore_mem>>)
      %c2_i32 = arith.constant 2 : i32
      %90 = arith.addi %71, %c2_i32 : i32
      %91 = arith.addi %67, %90 : i32
      %92 = arith.index_cast %91 : i32 to index
      %93 = memref.load %arg2[%92] : memref<16xi32, #tpu.memory_space<smem>>
      %94 = arith.addi %69, %90 : i32
      %c0_i32_39 = arith.constant 0 : i32
      %95 = tpu.memref_slice %arg8[%93, %c0_i32_39] : memref<64x32xf32, #tpu.memory_space<any>> -> memref<1x32xf32, #tpu.memory_space<any>>
      %c0_i32_40 = arith.constant 0 : i32
      %96 = tpu.memref_slice %arg10[%94, %c0_i32_40] : memref<16x32xf32, #tpu.memory_space<vmem>> -> memref<1x32xf32, #tpu.memory_space<vmem>>
      %97 = tpu.memref_slice %arg11[%68] : memref<2x!tpu.dma_semaphore, #tpu.memory_space<semaphore_mem>> -> memref<1x!tpu.dma_semaphore, #tpu.memory_space<semaphore_mem>>
      %98 = tpu.memref_squeeze %97 : memref<1x!tpu.dma_semaphore, #tpu.memory_space<semaphore_mem>> -> memref<!tpu.dma_semaphore, #tpu.memory_space<semaphore_mem>>
      tpu.enqueue_dma source(%95 : memref<1x32xf32, #tpu.memory_space<any>>) target(%96 : memref<1x32xf32, #tpu.memory_space<vmem>>) target_semaphore(%98 : memref<!tpu.dma_semaphore, #tpu.memory_space<semaphore_mem>>)
      %c3_i32 = arith.constant 3 : i32
      %99 = arith.addi %71, %c3_i32 : i32
      %100 = arith.addi %67, %99 : i32
      %101 = arith.index_cast %100 : i32 to index
      %102 = memref.load %arg2[%101] : memref<16xi32, #tpu.memory_space<smem>>
      %103 = arith.addi %69, %99 : i32
      %c0_i32_41 = arith.constant 0 : i32
      %104 = tpu.memref_slice %arg8[%102, %c0_i32_41] : memref<64x32xf32, #tpu.memory_space<any>> -> memref<1x32xf32, #tpu.memory_space<any>>
      %c0_i32_42 = arith.constant 0 : i32
      %105 = tpu.memref_slice %arg10[%103, %c0_i32_42] : memref<16x32xf32, #tpu.memory_space<vmem>> -> memref<1x32xf32, #tpu.memory_space<vmem>>
      %106 = tpu.memref_slice %arg11[%68] : memref<2x!tpu.dma_semaphore, #tpu.memory_space<semaphore_mem>> -> memref<1x!tpu.dma_semaphore, #tpu.memory_space<semaphore_mem>>
      %107 = tpu.memref_squeeze %106 : memref<1x!tpu.dma_semaphore, #tpu.memory_space<semaphore_mem>> -> memref<!tpu.dma_semaphore, #tpu.memory_space<semaphore_mem>>
      tpu.enqueue_dma source(%104 : memref<1x32xf32, #tpu.memory_space<any>>) target(%105 : memref<1x32xf32, #tpu.memory_space<vmem>>) target_semaphore(%107 : memref<!tpu.dma_semaphore, #tpu.memory_space<semaphore_mem>>)
      %c4_i32 = arith.constant 4 : i32
      %108 = arith.addi %71, %c4_i32 : i32
      %109 = arith.addi %67, %108 : i32
      %110 = arith.index_cast %109 : i32 to index
      %111 = memref.load %arg2[%110] : memref<16xi32, #tpu.memory_space<smem>>
      %112 = arith.addi %69, %108 : i32
      %c0_i32_43 = arith.constant 0 : i32
      %113 = tpu.memref_slice %arg8[%111, %c0_i32_43] : memref<64x32xf32, #tpu.memory_space<any>> -> memref<1x32xf32, #tpu.memory_space<any>>
      %c0_i32_44 = arith.constant 0 : i32
      %114 = tpu.memref_slice %arg10[%112, %c0_i32_44] : memref<16x32xf32, #tpu.memory_space<vmem>> -> memref<1x32xf32, #tpu.memory_space<vmem>>
      %115 = tpu.memref_slice %arg11[%68] : memref<2x!tpu.dma_semaphore, #tpu.memory_space<semaphore_mem>> -> memref<1x!tpu.dma_semaphore, #tpu.memory_space<semaphore_mem>>
      %116 = tpu.memref_squeeze %115 : memref<1x!tpu.dma_semaphore, #tpu.memory_space<semaphore_mem>> -> memref<!tpu.dma_semaphore, #tpu.memory_space<semaphore_mem>>
      tpu.enqueue_dma source(%113 : memref<1x32xf32, #tpu.memory_space<any>>) target(%114 : memref<1x32xf32, #tpu.memory_space<vmem>>) target_semaphore(%116 : memref<!tpu.dma_semaphore, #tpu.memory_space<semaphore_mem>>)
      %c5_i32 = arith.constant 5 : i32
      %117 = arith.addi %71, %c5_i32 : i32
      %118 = arith.addi %67, %117 : i32
      %119 = arith.index_cast %118 : i32 to index
      %120 = memref.load %arg2[%119] : memref<16xi32, #tpu.memory_space<smem>>
      %121 = arith.addi %69, %117 : i32
      %c0_i32_45 = arith.constant 0 : i32
      %122 = tpu.memref_slice %arg8[%120, %c0_i32_45] : memref<64x32xf32, #tpu.memory_space<any>> -> memref<1x32xf32, #tpu.memory_space<any>>
      %c0_i32_46 = arith.constant 0 : i32
      %123 = tpu.memref_slice %arg10[%121, %c0_i32_46] : memref<16x32xf32, #tpu.memory_space<vmem>> -> memref<1x32xf32, #tpu.memory_space<vmem>>
      %124 = tpu.memref_slice %arg11[%68] : memref<2x!tpu.dma_semaphore, #tpu.memory_space<semaphore_mem>> -> memref<1x!tpu.dma_semaphore, #tpu.memory_space<semaphore_mem>>
      %125 = tpu.memref_squeeze %124 : memref<1x!tpu.dma_semaphore, #tpu.memory_space<semaphore_mem>> -> memref<!tpu.dma_semaphore, #tpu.memory_space<semaphore_mem>>
      tpu.enqueue_dma source(%122 : memref<1x32xf32, #tpu.memory_space<any>>) target(%123 : memref<1x32xf32, #tpu.memory_space<vmem>>) target_semaphore(%125 : memref<!tpu.dma_semaphore, #tpu.memory_space<semaphore_mem>>)
      %c6_i32 = arith.constant 6 : i32
      %126 = arith.addi %71, %c6_i32 : i32
      %127 = arith.addi %67, %126 : i32
      %128 = arith.index_cast %127 : i32 to index
      %129 = memref.load %arg2[%128] : memref<16xi32, #tpu.memory_space<smem>>
      %130 = arith.addi %69, %126 : i32
      %c0_i32_47 = arith.constant 0 : i32
      %131 = tpu.memref_slice %arg8[%129, %c0_i32_47] : memref<64x32xf32, #tpu.memory_space<any>> -> memref<1x32xf32, #tpu.memory_space<any>>
      %c0_i32_48 = arith.constant 0 : i32
      %132 = tpu.memref_slice %arg10[%130, %c0_i32_48] : memref<16x32xf32, #tpu.memory_space<vmem>> -> memref<1x32xf32, #tpu.memory_space<vmem>>
      %133 = tpu.memref_slice %arg11[%68] : memref<2x!tpu.dma_semaphore, #tpu.memory_space<semaphore_mem>> -> memref<1x!tpu.dma_semaphore, #tpu.memory_space<semaphore_mem>>
      %134 = tpu.memref_squeeze %133 : memref<1x!tpu.dma_semaphore, #tpu.memory_space<semaphore_mem>> -> memref<!tpu.dma_semaphore, #tpu.memory_space<semaphore_mem>>
      tpu.enqueue_dma source(%131 : memref<1x32xf32, #tpu.memory_space<any>>) target(%132 : memref<1x32xf32, #tpu.memory_space<vmem>>) target_semaphore(%134 : memref<!tpu.dma_semaphore, #tpu.memory_space<semaphore_mem>>)
      %c7_i32 = arith.constant 7 : i32
      %135 = arith.addi %71, %c7_i32 : i32
      %136 = arith.addi %67, %135 : i32
      %137 = arith.index_cast %136 : i32 to index
      %138 = memref.load %arg2[%137] : memref<16xi32, #tpu.memory_space<smem>>
      %139 = arith.addi %69, %135 : i32
      %c0_i32_49 = arith.constant 0 : i32
      %140 = tpu.memref_slice %arg8[%138, %c0_i32_49] : memref<64x32xf32, #tpu.memory_space<any>> -> memref<1x32xf32, #tpu.memory_space<any>>
      %c0_i32_50 = arith.constant 0 : i32
      %141 = tpu.memref_slice %arg10[%139, %c0_i32_50] : memref<16x32xf32, #tpu.memory_space<vmem>> -> memref<1x32xf32, #tpu.memory_space<vmem>>
      %142 = tpu.memref_slice %arg11[%68] : memref<2x!tpu.dma_semaphore, #tpu.memory_space<semaphore_mem>> -> memref<1x!tpu.dma_semaphore, #tpu.memory_space<semaphore_mem>>
      %143 = tpu.memref_squeeze %142 : memref<1x!tpu.dma_semaphore, #tpu.memory_space<semaphore_mem>> -> memref<!tpu.dma_semaphore, #tpu.memory_space<semaphore_mem>>
      tpu.enqueue_dma source(%140 : memref<1x32xf32, #tpu.memory_space<any>>) target(%141 : memref<1x32xf32, #tpu.memory_space<vmem>>) target_semaphore(%143 : memref<!tpu.dma_semaphore, #tpu.memory_space<semaphore_mem>>)
      %c1_i32_51 = arith.constant 1 : i32
    } else {
    }
    %c0 = arith.constant 0 : index
    %c0_5 = arith.constant 0 : index
    %11 = vector.load %arg3[%c0, %c0_5] : memref<8x32xf32, #tpu.memory_space<vmem>>, vector<8x32xf32>
    %c0_6 = arith.constant 0 : index
    %c0_7 = arith.constant 0 : index
    %c0_8 = arith.constant 0 : index
    %12 = vector.load %arg4[%c0_6, %c0_7, %c0_8] : memref<1x8x1xi32, #tpu.memory_space<vmem>>, vector<1x8x1xi32>
    %13 = vector.shape_cast %12 : vector<1x8x1xi32> to vector<8x1xi32>
    %c0_9 = arith.constant 0 : index
    %c0_10 = arith.constant 0 : index
    %14 = vector.load %arg5[%c0_9, %c0_10] : memref<2x32xf32, #tpu.memory_space<vmem>>, vector<2x32xf32>
    %c0_i32_11 = arith.constant 0 : i32
    %15 = vector.broadcast %c0_i32_11 : i32 to vector<8x1xi32>
    %16 = arith.cmpi eq, %13, %15 : vector<8x1xi32>
    %17 = arith.extui %16 : vector<8x1xi1> to vector<8x1xi32>
    %18 = arith.sitofp %17 : vector<8x1xi32> to vector<8x1xf32>
    %19 = vector.extract_strided_slice %14 {offsets = [0, 0], sizes = [1, 32], strides = [1, 1]} : vector<2x32xf32> to vector<1x32xf32>
    %20 = vector.broadcast %18 : vector<8x1xf32> to vector<8x32xf32>
    %21 = vector.broadcast %19 : vector<1x32xf32> to vector<8x32xf32>
    %22 = arith.mulf %20, %21 : vector<8x32xf32>
    %23 = arith.addf %11, %22 : vector<8x32xf32>
    %c1_i32_12 = arith.constant 1 : i32
    %24 = vector.broadcast %c1_i32_12 : i32 to vector<8x1xi32>
    %25 = arith.cmpi eq, %13, %24 : vector<8x1xi32>
    %26 = arith.extui %25 : vector<8x1xi1> to vector<8x1xi32>
    %27 = arith.sitofp %26 : vector<8x1xi32> to vector<8x1xf32>
    %28 = vector.extract_strided_slice %14 {offsets = [1, 0], sizes = [1, 32], strides = [1, 1]} : vector<2x32xf32> to vector<1x32xf32>
    %29 = vector.broadcast %27 : vector<8x1xf32> to vector<8x32xf32>
    %30 = vector.broadcast %28 : vector<1x32xf32> to vector<8x32xf32>
    %31 = arith.mulf %29, %30 : vector<8x32xf32>
    %32 = arith.addf %23, %31 : vector<8x32xf32>
    %c8_i32_13 = arith.constant 8 : i32
    %33 = arith.muli %3, %c8_i32_13 : i32
    %34 = tpu.assume_multiple %33, 8 : i32
    %c0_i32_14 = arith.constant 0 : i32
    %35 = tpu.memref_slice %arg10[%34, %c0_i32_14] : memref<16x32xf32, #tpu.memory_space<vmem>> -> memref<8x32xf32, #tpu.memory_space<vmem>>
    %c0_i32_15 = arith.constant 0 : i32
    %36 = tpu.memref_slice %arg10[%34, %c0_i32_15] : memref<16x32xf32, #tpu.memory_space<vmem>> -> memref<8x32xf32, #tpu.memory_space<vmem>>
    %37 = tpu.memref_slice %arg11[%3] : memref<2x!tpu.dma_semaphore, #tpu.memory_space<semaphore_mem>> -> memref<1x!tpu.dma_semaphore, #tpu.memory_space<semaphore_mem>>
    %38 = tpu.memref_squeeze %37 : memref<1x!tpu.dma_semaphore, #tpu.memory_space<semaphore_mem>> -> memref<!tpu.dma_semaphore, #tpu.memory_space<semaphore_mem>>
    tpu.wait_dma2 semaphore(%38 : memref<!tpu.dma_semaphore, #tpu.memory_space<semaphore_mem>>) src(%35 : memref<8x32xf32, #tpu.memory_space<vmem>>) dst(%36 : memref<8x32xf32, #tpu.memory_space<vmem>>)
    %39 = arith.index_cast %34 : i32 to index
    %c0_16 = arith.constant 0 : index
    %40 = vector.load %arg10[%39, %c0_16] : memref<16x32xf32, #tpu.memory_space<vmem>>, vector<8x32xf32>
    %41 = arith.addf %40, %32 : vector<8x32xf32>
    %cst = arith.constant dense<0.000000e+00> : vector<8xf32>
    %42 = vector.multi_reduction <add>, %41, %cst [1] : vector<8x32xf32> to vector<8xf32>
    %43 = vector.shape_cast %42 : vector<8xf32> to vector<8x1xf32>
    %cst_17 = arith.constant 3.200000e+01 : f32
    %44 = vector.broadcast %cst_17 : f32 to vector<8x1xf32>
    %45 = arith.divf %43, %44 : vector<8x1xf32>
    %46 = vector.broadcast %45 : vector<8x1xf32> to vector<8x32xf32>
    %47 = arith.subf %41, %46 : vector<8x32xf32>
    %48 = arith.mulf %47, %47 : vector<8x32xf32>
    %cst_18 = arith.constant dense<0.000000e+00> : vector<8xf32>
    %49 = vector.multi_reduction <add>, %48, %cst_18 [1] : vector<8x32xf32> to vector<8xf32>
    %50 = vector.shape_cast %49 : vector<8xf32> to vector<8x1xf32>
    %cst_19 = arith.constant 3.200000e+01 : f32
    %51 = vector.broadcast %cst_19 : f32 to vector<8x1xf32>
    %52 = arith.divf %50, %51 : vector<8x1xf32>
    %cst_20 = arith.constant 9.99999996E-13 : f32
    %53 = vector.broadcast %cst_20 : f32 to vector<8x1xf32>
    %54 = arith.addf %52, %53 : vector<8x1xf32>
    %55 = math.rsqrt %54 : vector<8x1xf32>
    %56 = vector.broadcast %55 : vector<8x1xf32> to vector<8x32xf32>
    %57 = arith.mulf %47, %56 : vector<8x32xf32>
    %c0_21 = arith.constant 0 : index
    %c0_22 = arith.constant 0 : index
    %58 = vector.load %arg6[%c0_21, %c0_22] : memref<1x32xf32, #tpu.memory_space<vmem>>, vector<1x32xf32>
    %59 = vector.broadcast %58 : vector<1x32xf32> to vector<8x32xf32>
    %60 = arith.mulf %57, %59 : vector<8x32xf32>
    %c0_23 = arith.constant 0 : index
    %c0_24 = arith.constant 0 : index
    %61 = vector.load %arg7[%c0_23, %c0_24] : memref<1x32xf32, #tpu.memory_space<vmem>>, vector<1x32xf32>
    %62 = vector.broadcast %61 : vector<1x32xf32> to vector<8x32xf32>
    %63 = arith.addf %60, %62 : vector<8x32xf32>
    %c0_25 = arith.constant 0 : index
    %c0_26 = arith.constant 0 : index
    %c0_27 = arith.constant 0 : index
    %64 = vector.load %arg9[%c0_25, %c0_26, %c0_27] : memref<1x8x32xf32, #tpu.memory_space<vmem>>, vector<1x8x32xf32>
    %65 = vector.shape_cast %64 : vector<1x8x32xf32> to vector<8x32xf32>
    %66 = vector.shape_cast %63 : vector<8x32xf32> to vector<1x8x32xf32>
    tpu.vector_store %arg9[%c0_25, %c0_26, %c0_27], %66 {strides = array<i32>} : memref<1x8x32xf32, #tpu.memory_space<vmem>>, vector<1x8x32xf32>,
    return
  }
  func.func @transform_0(%arg0: i32, %arg1: i32, %arg2: memref<16xi32, #tpu.memory_space<smem>>) -> (i32, i32) {
    %c0_i32 = arith.constant 0 : i32
    %c0_i32_0 = arith.constant 0 : i32
    return %arg1, %c0_i32 : i32, i32
  }
  func.func @transform_1(%arg0: i32, %arg1: i32, %arg2: memref<16xi32, #tpu.memory_space<smem>>) -> (i32, i32, i32) {
    %c0_i32 = arith.constant 0 : i32
    %c0_i32_0 = arith.constant 0 : i32
    return %arg0, %arg1, %c0_i32 : i32, i32, i32
  }
  func.func @transform_2(%arg0: i32, %arg1: i32, %arg2: memref<16xi32, #tpu.memory_space<smem>>) -> (i32, i32) {
    %c0_i32 = arith.constant 0 : i32
    %c0_i32_0 = arith.constant 0 : i32
    %c0_i32_1 = arith.constant 0 : i32
    return %c0_i32, %c0_i32_0 : i32, i32
  }
  func.func @transform_3(%arg0: i32, %arg1: i32, %arg2: memref<16xi32, #tpu.memory_space<smem>>) -> (i32, i32) {
    %c0_i32 = arith.constant 0 : i32
    %c0_i32_0 = arith.constant 0 : i32
    %c0_i32_1 = arith.constant 0 : i32
    return %c0_i32, %c0_i32_0 : i32, i32
  }
  func.func @transform_4(%arg0: i32, %arg1: i32, %arg2: memref<16xi32, #tpu.memory_space<smem>>) -> (i32, i32) {
    %c0_i32 = arith.constant 0 : i32
    %c0_i32_0 = arith.constant 0 : i32
    %c0_i32_1 = arith.constant 0 : i32
    return %c0_i32, %c0_i32_0 : i32, i32
  }
  func.func @transform_6(%arg0: i32, %arg1: i32, %arg2: memref<16xi32, #tpu.memory_space<smem>>) -> (i32, i32, i32) {
    %c0_i32 = arith.constant 0 : i32
    %c0_i32_0 = arith.constant 0 : i32
    return %arg0, %arg1, %c0_i32 : i32, i32, i32
  }
}

</mosaic_0001>

<llo_original>
// kernel: tpu_custom_call.1
$region0: #{tpu_custom_call.1}
  #allocation0 [shape = 'u32[]', space=smem, size = 0x4, offset = 0x4, fixed_abs, tag = 'smem constant byte address 0x4 - core index']
  #allocation1 [shape = 'u32[144,128]{1,0:T(1,128)}', space=vmem, size = 0x12000, scoped, tag = 'internal scratch']
  #allocation2 [shape = 'f32[16,32]{1,0:T(8,128)}', space=vmem, size = 0x2000, scoped, tag = 'scratch operand']
  #allocation3 [shape = 's32[2]{0}', space=sflag, size = 0x8, scoped, tag = 'scratch operand']
  #allocation4 [shape = 's32[1]{0}', space=sflag, size = 0x4, scoped, tag = 'scoped memory for tpu_custom_call.1']
  #allocation5 [shape = 'u8[512]{0}', space=smem, size = 0x200, scoped, tag = 'prefetched SMEM operand 0']
  #allocation8 [shape = 's32[]', space=sflag, size = 0x4, offset = 0, fixed_abs, tag = 'sflag constant byte address 0x0 - dummy sync flag']
  #allocation9 [shape = 's32[]', space=sflag, size = 0x4, offset = 0, fixed_abs, tag = 'sflag constant byte address 0x0 - dummy sync flag']
  #allocation10 [shape = 's32[]', space=sflag, size = 0x4, offset = 0, fixed_abs, tag = 'sflag constant byte address 0x0 - dummy sync flag']
  #allocation11 [shape = 's32[]', space=sflag, size = 0x4, offset = 0, fixed_abs, tag = 'sflag constant byte address 0x0 - dummy sync flag']
  #allocation12 [shape = 's32[]', space=sflag, size = 0x4, offset = 0, fixed_abs, tag = 'sflag constant byte address 0x0 - dummy sync flag']
  #allocation13 [shape = 's32[]', space=sflag, size = 0x4, offset = 0, fixed_abs, tag = 'sflag constant byte address 0x0 - dummy sync flag']
  #allocation14 [shape = 's32[]', space=sflag, size = 0x4, offset = 0, fixed_abs, tag = 'sflag constant byte address 0x0 - dummy sync flag']
  #allocation15 [shape = 's32[]', space=sflag, size = 0x4, offset = 0, fixed_abs, tag = 'sflag constant byte address 0x0 - dummy sync flag']
  #allocation16 [shape = 's32[]', space=sflag, size = 0x4, offset = 0, fixed_abs, tag = 'sflag constant byte address 0x0 - dummy sync flag']
  #allocation17 [shape = 's32[]', space=sflag, size = 0x4, offset = 0, fixed_abs, tag = 'sflag constant byte address 0x0 - dummy sync flag']
  #allocation18 [shape = 's32[]', space=sflag, size = 0x4, offset = 0, fixed_abs, tag = 'sflag constant byte address 0x0 - dummy sync flag']
  #allocation19 [shape = 's32[]', space=sflag, size = 0x4, offset = 0, fixed_abs, tag = 'sflag constant byte address 0x0 - dummy sync flag']
  #allocation20 [shape = 's32[]', space=sflag, size = 0x4, offset = 0, fixed_abs, tag = 'sflag constant byte address 0x0 - dummy sync flag']
  #allocation21 [shape = 's32[]', space=sflag, size = 0x4, offset = 0, fixed_abs, tag = 'sflag constant byte address 0x0 - dummy sync flag']
  #allocation22 [shape = 's32[]', space=sflag, size = 0x4, offset = 0, fixed_abs, tag = 'sflag constant byte address 0x0 - dummy sync flag']
  #allocation23 [shape = 's32[]', space=sflag, size = 0x4, offset = 0, fixed_abs, tag = 'sflag constant byte address 0x0 - dummy sync flag']
  %s0 = inlined_call_operand.vmem [shape: s32[16], index: 0, kind: input, shape index: {}]
  %s1 = inlined_call_operand.vmem [shape: f32[8,32], index: 1, kind: input, shape index: {}]
  %s2 = inlined_call_operand.vmem [shape: s32[2,8,1], index: 2, kind: input, shape index: {}]
  %s3 = inlined_call_operand.vmem [shape: f32[2,32], index: 3, kind: input, shape index: {}]
  %s4 = inlined_call_operand.vmem [shape: f32[1,32], index: 4, kind: input, shape index: {}]
  %s5 = inlined_call_operand.vmem [shape: f32[1,32], index: 5, kind: input, shape index: {}]
  %s6 = inlined_call_operand.vmem [shape: f32[64,32], index: 6, kind: input, shape index: {}]
  %s7 = inlined_call_operand.hbm [shape: f32[2,8,32], index: 7, kind: output, shape index: {}]
  %s8 = sld [smem:[#allocation0]]
  $region541: #{tpu_custom_call.1} parent=0
    _
  %s10 = ssub.s32 1, %s8
  %s11 = scalar_select 0, %s10, %s8
  %s12 = sshll.u32 %s0, 4
  %s13 = int_to_ptr.vmem [resolvable:$true] %s12
  %15 = dma.vmem_to_smem %s13, 16, [#allocation5], [#allocation4]
  %16 = dma.done [#allocation4], 16
  %17 = sfence
  $region1: #{tpu_custom_call.1} parent=0
    #allocation6 [shape = 'u8[8192]{0}', space=vmem, size = 0x2000, scoped, tag = 'output window, operand 0']
    #allocation7 [shape = 's32[2]{0}', space=sflag, size = 0x8, scoped, tag = 'scoped memory for tpu_custom_call.1']
    %18 = vsyncpa [#allocation7], 0
    %s19 = scalar_lea.sflag [#allocation7], 1
    %20 = vsyncpa %s19, 0
    loop: start=0, step=1, limit=4
    $region2: #{tpu_custom_call.1} parent=1 // loop_pre_header
      _
    $region3: #{tpu_custom_call.1} parent=1 // loop_header
      %s22 = sphi 0, %s26
      %p23 = scmp.ge.s32.totalorder %s22, 4
      %s29 = sphi 0, %s41
      %s30 = sphi 0, %s37
      %s31 = sphi 0, %s29
      %s32 = sphi 0, %s30
      %s33 = sphi 0, %s31
      %s34 = sphi 0, %s32
      %s44 = sphi 0, %s46
      %s47 = sphi 0, %s44
      %s48 = sphi 0, %s47
      %s64 = sphi 0, %s48
      %s72 = sphi 0, %s74
      %s75 = sphi 0, %s72
      %s76 = sphi 0, %s75
      %s92 = sphi 0, %s76
      %s96 = sphi 0, %s96
      %s98 = sphi 0, %s96
      %s99 = sphi 0, %s98
      %s113 = sphi 0, %s99
      %s117 = sphi 0, %s117
      %s119 = sphi 0, %s117
      %s120 = sphi 0, %s119
      %s134 = sphi 0, %s120
      %s138 = sphi 0, %s138
      %s140 = sphi 0, %s138
      %s141 = sphi 0, %s140
      %s155 = sphi 0, %s141
      %s163 = sphi 0, %s165
      %s166 = sphi 0, %s163
      %s167 = sphi 0, %s166
      %s183 = sphi 0, %s167
    $region4: #{tpu_custom_call.1} parent=1 // loop_header_branch
      %25 = sbr.rel (%p23) target = $region8
    $region5: #{tpu_custom_call.1} parent=1 // loop_body
      %s27 = ssub.s32 %s22, 1
      %s28 = ssub.s32 %s22, 2
      %s35 = sadd.s32 1, %s30
      %p36 = scmp.ge.s32.totalorder %s35, 1
      %s37 = scalar_select %p36, 0, %s35
      %s38 = sadd.s32 1, %s29
      %s39 = scalar_select %p36, %s38, %s29
      %p40 = scmp.ge.s32.totalorder %s39, 2
      %s41 = scalar_select %p40, 0, %s39
      %s42 = ssub.s32 %s30, %s37
      %p43 = scmp.eq.s32.totalorder %s42, 0
      %s45 = sadd.s32 %s44, 1
      %s46 = scalar_select %p43, %s44, %s45
      %p49 = pneg %p43
      %p50 = scmp.eq.s32.totalorder %s22, 1
      %p51 = por %p49, %p50
      %p52 = scmp.ne.s32.totalorder %s44, %s47
      %p53 = scmp.eq.s32.totalorder %s22, 0
      %p54 = por %p52, %p53
      %p55 = scmp.ne.s32.totalorder %s44, %s47
      %p56 = scmp.eq.s32.totalorder %s27, 1
      %p57 = por %p55, %p56
      %p58 = scmp.ne.s32.totalorder %s47, %s48
      %p59 = scmp.eq.s32.totalorder %s27, 0
      %p60 = por %p58, %p59
      %p61 = scmp.ne.s32.totalorder %s47, %s48
      %p62 = scmp.eq.s32.totalorder %s28, 1
      %p63 = por %p61, %p62
      %p65 = scmp.ne.s32.totalorder %s48, %s64
      %p66 = scmp.eq.s32.totalorder %s28, 0
      %p67 = por %p65, %p66
      %s68 = ssub.s32 %s29, %s41
      %s69 = ssub.s32 %s30, %s37
      %s70 = sor.u32 %s68, %s69
      %p71 = scmp.eq.s32.totalorder %s70, 0
      %s73 = sadd.s32 %s72, 1
      %s74 = scalar_select %p71, %s72, %s73
      %p77 = pneg %p71
      %p78 = scmp.eq.s32.totalorder %s22, 1
      %p79 = por %p77, %p78
      %p80 = scmp.ne.s32.totalorder %s72, %s75
      %p81 = scmp.eq.s32.totalorder %s22, 0
      %p82 = por %p80, %p81
      %p83 = scmp.ne.s32.totalorder %s72, %s75
      %p84 = scmp.eq.s32.totalorder %s27, 1
      %p85 = por %p83, %p84
      %p86 = scmp.ne.s32.totalorder %s75, %s76
      %p87 = scmp.eq.s32.totalorder %s27, 0
      %p88 = por %p86, %p87
      %p89 = scmp.ne.s32.totalorder %s75, %s76
      %p90 = scmp.eq.s32.totalorder %s28, 1
      %p91 = por %p89, %p90
      %p93 = scmp.ne.s32.totalorder %s76, %s92
      %p94 = scmp.eq.s32.totalorder %s28, 0
      %p95 = por %p93, %p94
      %s97 = sadd.s32 %s96, 1
      %p100 = scmp.eq.s32.totalorder %s22, 1
      %p101 = scmp.ne.s32.totalorder %s96, %s98
      %p102 = scmp.eq.s32.totalorder %s22, 0
      %p103 = por %p101, %p102
      %p104 = scmp.ne.s32.totalorder %s96, %s98
      %p105 = scmp.eq.s32.totalorder %s27, 1
      %p106 = por %p104, %p105
      %p107 = scmp.ne.s32.totalorder %s98, %s99
      %p108 = scmp.eq.s32.totalorder %s27, 0
      %p109 = por %p107, %p108
      %p110 = scmp.ne.s32.totalorder %s98, %s99
      %p111 = scmp.eq.s32.totalorder %s28, 1
      %p112 = por %p110, %p111
      %p114 = scmp.ne.s32.totalorder %s99, %s113
      %p115 = scmp.eq.s32.totalorder %s28, 0
      %p116 = por %p114, %p115
      %s118 = sadd.s32 %s117, 1
      %p121 = scmp.eq.s32.totalorder %s22, 1
      %p122 = scmp.ne.s32.totalorder %s117, %s119
      %p123 = scmp.eq.s32.totalorder %s22, 0
      %p124 = por %p122, %p123
      %p125 = scmp.ne.s32.totalorder %s117, %s119
      %p126 = scmp.eq.s32.totalorder %s27, 1
      %p127 = por %p125, %p126
      %p128 = scmp.ne.s32.totalorder %s119, %s120
      %p129 = scmp.eq.s32.totalorder %s27, 0
      %p130 = por %p128, %p129
      %p131 = scmp.ne.s32.totalorder %s119, %s120
      %p132 = scmp.eq.s32.totalorder %s28, 1
      %p133 = por %p131, %p132
      %p135 = scmp.ne.s32.totalorder %s120, %s134
      %p136 = scmp.eq.s32.totalorder %s28, 0
      %p137 = por %p135, %p136
      %s139 = sadd.s32 %s138, 1
      %p142 = scmp.eq.s32.totalorder %s22, 1
      %p143 = scmp.ne.s32.totalorder %s138, %s140
      %p144 = scmp.eq.s32.totalorder %s22, 0
      %p145 = por %p143, %p144
      %p146 = scmp.ne.s32.totalorder %s138, %s140
      %p147 = scmp.eq.s32.totalorder %s27, 1
      %p148 = por %p146, %p147
      %p149 = scmp.ne.s32.totalorder %s140, %s141
      %p150 = scmp.eq.s32.totalorder %s27, 0
      %p151 = por %p149, %p150
      %p152 = scmp.ne.s32.totalorder %s140, %s141
      %p153 = scmp.eq.s32.totalorder %s28, 1
      %p154 = por %p152, %p153
      %p156 = scmp.ne.s32.totalorder %s141, %s155
      %p157 = scmp.eq.s32.totalorder %s28, 0
      %p158 = por %p156, %p157
      %s159 = ssub.s32 %s29, %s41
      %s160 = ssub.s32 %s30, %s37
      %s161 = sor.u32 %s159, %s160
      %p162 = scmp.eq.s32.totalorder %s161, 0
      %s164 = sadd.s32 %s163, 1
      %s165 = scalar_select %p162, %s163, %s164
      %p168 = pneg %p162
      %p169 = scmp.eq.s32.totalorder %s22, 1
      %p170 = por %p168, %p169
      %p171 = scmp.ne.s32.totalorder %s163, %s166
      %p172 = scmp.eq.s32.totalorder %s22, 0
      %p173 = por %p171, %p172
      %p174 = scmp.ne.s32.totalorder %s163, %s166
      %p175 = scmp.eq.s32.totalorder %s27, 1
      %p176 = por %p174, %p175
      %p177 = scmp.ne.s32.totalorder %s166, %s167
      %p178 = scmp.eq.s32.totalorder %s27, 0
      %p179 = por %p177, %p178
      %p180 = scmp.ne.s32.totalorder %s166, %s167
      %p181 = scmp.eq.s32.totalorder %s28, 1
      %p182 = por %p180, %p181
      %p184 = scmp.ne.s32.totalorder %s167, %s183
      %p185 = scmp.eq.s32.totalorder %s28, 0
      %p186 = por %p184, %p185
      %p187 = scmp.le.s32.totalorder 1, %s22
      %p188 = scmp.lt.s32.totalorder %s22, 3
      %p189 = pnand %p187, %p188
      %p190 = pneg %p189
      // Predicated region
      $region9: #{tpu_custom_call.1} parent=5 // pred_check
        _
      $region10: #{tpu_custom_call.1} parent=5 // pred_check_branch
        %192 = sbr.rel (%p189) target = $region12
      $region11: #{tpu_custom_call.1} parent=5 // pred_region
        %s193 = ssub.s32 %s22, 1
        // Predicated region
        $region13: #{tpu_custom_call.1} parent=11 // pred_check
          %p194 = pneg %p60
        $region14: #{tpu_custom_call.1} parent=11 // pred_check_branch
          %196 = sbr.rel (%p194) target = $region16
        $region15: #{tpu_custom_call.1} parent=11 // pred_region
          %p197 = scmp.lt.s32.totalorder %s32, 0
          %s198 = scalar_select %p197, %s32, 0
          %s199 = smul.addr %s198, 8
          %s200 = scalar_lea.vmem %s1, %s199
        $region16: #{tpu_custom_call.1} parent=11 // pred_fallthru
          _
        // Predicated region
        $region17: #{tpu_custom_call.1} parent=11 // pred_check
          %p201 = pneg %p109
        $region18: #{tpu_custom_call.1} parent=11 // pred_check_branch
          %203 = sbr.rel (%p201) target = $region20
        $region19: #{tpu_custom_call.1} parent=11 // pred_region
          _
        $region20: #{tpu_custom_call.1} parent=11 // pred_fallthru
          _
        // Predicated region
        $region21: #{tpu_custom_call.1} parent=11 // pred_check
          %p204 = pneg %p130
        $region22: #{tpu_custom_call.1} parent=11 // pred_check_branch
          %206 = sbr.rel (%p204) target = $region24
        $region23: #{tpu_custom_call.1} parent=11 // pred_region
          _
        $region24: #{tpu_custom_call.1} parent=11 // pred_fallthru
          _
        // Predicated region
        $region25: #{tpu_custom_call.1} parent=11 // pred_check
          %p207 = pneg %p151
        $region26: #{tpu_custom_call.1} parent=11 // pred_check_branch
          %209 = sbr.rel (%p207) target = $region28
        $region27: #{tpu_custom_call.1} parent=11 // pred_region
          _
        $region28: #{tpu_custom_call.1} parent=11 // pred_fallthru
          _
      $region12: #{tpu_custom_call.1} parent=5 // pred_fallthru
        _
      %p210 = scmp.lt.s32.totalorder %s22, 2
      // Predicated region
      $region29: #{tpu_custom_call.1} parent=5 // pred_check
        %p211 = pneg %p210
      $region30: #{tpu_custom_call.1} parent=5 // pred_check_branch
        %213 = sbr.rel (%p211) target = $region32
      $region31: #{tpu_custom_call.1} parent=5 // pred_region
        // Predicated region
        $region33: #{tpu_custom_call.1} parent=31 // pred_check
          %p214 = pneg %p82
        $region34: #{tpu_custom_call.1} parent=31 // pred_check_branch
          %216 = sbr.rel (%p214) target = $region36
        $region35: #{tpu_custom_call.1} parent=31 // pred_region
          %p217 = scmp.lt.s32.totalorder %s29, 1
          %s218 = scalar_select %p217, %s29, 1
          %p219 = scmp.lt.s32.totalorder %s30, 0
          %s220 = scalar_select %p219, %s30, 0
          %s221 = sadd.s32 %s220, %s218
          %s222 = smul.addr %s221, 8
          %s223 = scalar_lea.vmem %s2, %s222
        $region36: #{tpu_custom_call.1} parent=31 // pred_fallthru
          _
      $region32: #{tpu_custom_call.1} parent=5 // pred_fallthru
        _
      %p224 = scmp.le.s32.totalorder 1, %s22
      %p225 = scmp.lt.s32.totalorder %s22, 3
      %p226 = pnand %p224, %p225
      %p227 = pneg %p226
      // Predicated region
      $region37: #{tpu_custom_call.1} parent=5 // pred_check
        _
      $region38: #{tpu_custom_call.1} parent=5 // pred_check_branch
        %229 = sbr.rel (%p226) target = $region40
      $region39: #{tpu_custom_call.1} parent=5 // pred_region
        %s230 = ssub.s32 %s22, 1
        %p231 = scmp.lt.s32.totalorder %s32, 0
        %s232 = scalar_select %p231, %s32, 0
        %s233 = smul.addr %s232, 8
        %s234 = scalar_lea.vmem %s1, %s233
        %p235 = pneg %p60
        %p236 = pneg %p57
        %p237 = scmp.lt.s32.totalorder %s31, 1
        %s238 = scalar_select %p237, %s31, 1
        %p239 = scmp.lt.s32.totalorder %s32, 0
        %s240 = scalar_select %p239, %s32, 0
        %s241 = sadd.s32 %s240, %s238
        %s242 = smul.addr %s241, 8
        %s243 = scalar_lea.vmem %s2, %s242
        %p244 = pneg %p88
        %p245 = pneg %p85
        %p246 = pneg %p109
        %p247 = pneg %p106
        %p248 = pneg %p130
        %p249 = pneg %p127
        %p250 = pneg %p151
        %p251 = pneg %p148
        %p252 = pneg %p179
        %p253 = pneg %p176
        %s254 = sand.u32 %s166, 1
        %s255 = scalar_lea.sflag [#allocation7], %s254
        %s256 = sand.u32 %s166, 1
        %s257 = smul.addr %s256, 8
        %s258 = scalar_lea.vmem [#allocation6], %s257
        %p259 = scmp.lt.s32.totalorder %s32, 0
        %s260 = scalar_select %p259, %s32, 0
        %s261 = smul.addr %s260, 8
        %s262 = scalar_lea.vmem %s1, %s261
        %p263 = scmp.lt.s32.totalorder %s31, 1
        %s264 = scalar_select %p263, %s31, 1
        %p265 = scmp.lt.s32.totalorder %s32, 0
        %s266 = scalar_select %p265, %s32, 0
        %s267 = sadd.s32 %s266, %s264
        %s268 = smul.addr %s267, 8
        %s269 = scalar_lea.vmem %s2, %s268
        %s270 = sadd.s32 %s31, %s32
        %s271 = smul.u32 %s270, 8
        %s272 = sand.u32 %s32, 1
        %p273 = scmp.eq.s32.totalorder %s32, 0
        // Predicated region
        $region41: #{tpu_custom_call.1} parent=39 // pred_check
          %p274 = pneg %p273
        $region42: #{tpu_custom_call.1} parent=39 // pred_check_branch
          %276 = sbr.rel (%p274) target = $region44
        $region43: #{tpu_custom_call.1} parent=39 // pred_region
          %s277 = smul.u32 %s272, 8
          %s278 = sadd.s32 %s271, 0
          %s279 = sld [smem:[#allocation5 + %s278]]
          %s280 = sadd.s32 %s277, 0
          %s281 = scalar_lea.vmem %s6, %s279
          %s282 = scalar_lea.vmem [#allocation2], %s280
          %s283 = scalar_lea.sflag [#allocation3], %s272
          %p285 = scmp.lt.u32.totalorder 1, 8
          %p286 = pneg %p285
          // Predicated region
          $region45: #{tpu_custom_call.1} parent=43 // pred_check
            _
          $region46: #{tpu_custom_call.1} parent=43 // pred_check_branch
            %288 = sbr.rel (%p285) target = $region48
          $region47: #{tpu_custom_call.1} parent=43 // pred_region
            %s304 = sand.u32 1, 7
            %p305 = scmp.eq.s32.totalorder %s304, 0
            %p306 = pneg %p305
            // Predicated region
            $region60: #{tpu_custom_call.1} parent=47 // pred_check
              _
            $region61: #{tpu_custom_call.1} parent=47 // pred_check_branch
              %308 = sbr.rel (%p305) target = $region63
            $region62: #{tpu_custom_call.1} parent=47 // pred_region
              %s309 = sand.u32 1, 7
              %s310 = ssub.s32 1, %s309
              %s311 = scalar_lea.vmem %s281, %s310
              %s312 = ssub.s32 1, %s309
              %s313 = scalar_lea.vmem %s282, %s312 [#allocation2]
              %s314 = sshll.u32 1, %s309
              %s315 = ssub.s32 %s314, 1
              loop: start=0, step=1, limit=1
              $region64: #{tpu_custom_call.1} parent=62 // loop_pre_header
                _
              $region65: #{tpu_custom_call.1} parent=62 // loop_header
                %s317 = sphi 0, %s321
                %p318 = scmp.ge.s32.totalorder %s317, 1
                %s322 = sphi %s311, %s311
                %s323 = sphi %s313, %s313
              $region66: #{tpu_custom_call.1} parent=62 // loop_header_branch
                %320 = sbr.rel (%p318) target = $region70
              $region67: #{tpu_custom_call.1} parent=62 // loop_body
                %v324 = vld [vmem:[%s322] sm:%s315]
                %325 = vst [vmem:[%s323] sm:%s315] %v324
              $region68: #{tpu_custom_call.1} parent=62 // loop_footer
                %s321 = sadd.s32 1, %s317
              $region69: #{tpu_custom_call.1} parent=62 // loop_footer_branch
                %316 = sbr.rel target = $region65
              $region70: #{tpu_custom_call.1} parent=62 // loop_exit
                _
            $region63: #{tpu_custom_call.1} parent=47 // pred_fallthru
              _
          $region48: #{tpu_custom_call.1} parent=43 // pred_fallthru
            _
          // Predicated region
          $region49: #{tpu_custom_call.1} parent=43 // pred_check
            %p289 = pneg %p285
          $region50: #{tpu_custom_call.1} parent=43 // pred_check_branch
            %291 = sbr.rel (%p289) target = $region52
          $region51: #{tpu_custom_call.1} parent=43 // pred_region
            %s292 = sshll.u32 1, 1
            %s293 = ssub.s32 %s292, 1
            loop: start=0, step=1, limit=1
            $region53: #{tpu_custom_call.1} parent=51 // loop_pre_header
              _
            $region54: #{tpu_custom_call.1} parent=51 // loop_header
              %s295 = sphi 0, %s299
              %p296 = scmp.ge.s32.totalorder %s295, 1
              %s300 = sphi %s281, %s281
              %s301 = sphi %s282, %s282
            $region55: #{tpu_custom_call.1} parent=51 // loop_header_branch
              %298 = sbr.rel (%p296) target = $region59
            $region56: #{tpu_custom_call.1} parent=51 // loop_body
              %v302 = vld [vmem:[%s300] sm:%s293]
              %303 = vst [vmem:[%s301] sm:%s293] %v302
            $region57: #{tpu_custom_call.1} parent=51 // loop_footer
              %s299 = sadd.s32 1, %s295
            $region58: #{tpu_custom_call.1} parent=51 // loop_footer_branch
              %294 = sbr.rel target = $region54
            $region59: #{tpu_custom_call.1} parent=51 // loop_exit
              _
          $region52: #{tpu_custom_call.1} parent=43 // pred_fallthru
            _
          // Predicated region
          $region71: #{tpu_custom_call.1} parent=43 // pred_check
            _
          $region72: #{tpu_custom_call.1} parent=43 // pred_check_branch
            %328 = sbr.rel (0) target = $region74
          $region73: #{tpu_custom_call.1} parent=43 // pred_region
            %329 = vsyncadd %s283, 16
          $region74: #{tpu_custom_call.1} parent=43 // pred_fallthru
            _
          %s330 = sadd.s32 0, 1
          %s331 = sadd.s32 %s271, %s330
          %s332 = sld [smem:[#allocation5 + %s331]]
          %s333 = sadd.s32 %s277, %s330
          %s334 = scalar_lea.vmem %s6, %s332
          %s335 = scalar_lea.vmem [#allocation2], %s333
          %p337 = scmp.lt.u32.totalorder 1, 8
          %p338 = pneg %p337
          // Predicated region
          $region75: #{tpu_custom_call.1} parent=43 // pred_check
            _
          $region76: #{tpu_custom_call.1} parent=43 // pred_check_branch
            %340 = sbr.rel (%p337) target = $region78
          $region77: #{tpu_custom_call.1} parent=43 // pred_region
            %s356 = sand.u32 1, 7
            %p357 = scmp.eq.s32.totalorder %s356, 0
            %p358 = pneg %p357
            // Predicated region
            $region90: #{tpu_custom_call.1} parent=77 // pred_check
              _
            $region91: #{tpu_custom_call.1} parent=77 // pred_check_branch
              %360 = sbr.rel (%p357) target = $region93
            $region92: #{tpu_custom_call.1} parent=77 // pred_region
              %s361 = sand.u32 1, 7
              %s362 = ssub.s32 1, %s361
              %s363 = scalar_lea.vmem %s334, %s362
              %s364 = ssub.s32 1, %s361
              %s365 = scalar_lea.vmem %s335, %s364 [#allocation2]
              %s366 = sshll.u32 1, %s361
              %s367 = ssub.s32 %s366, 1
              loop: start=0, step=1, limit=1
              $region94: #{tpu_custom_call.1} parent=92 // loop_pre_header
                _
              $region95: #{tpu_custom_call.1} parent=92 // loop_header
                %s369 = sphi 0, %s373
                %p370 = scmp.ge.s32.totalorder %s369, 1
                %s374 = sphi %s363, %s363
                %s375 = sphi %s365, %s365
              $region96: #{tpu_custom_call.1} parent=92 // loop_header_branch
                %372 = sbr.rel (%p370) target = $region100
              $region97: #{tpu_custom_call.1} parent=92 // loop_body
                %v376 = vld [vmem:[%s374] sm:%s367]
                %377 = vst [vmem:[%s375] sm:%s367] %v376
              $region98: #{tpu_custom_call.1} parent=92 // loop_footer
                %s373 = sadd.s32 1, %s369
              $region99: #{tpu_custom_call.1} parent=92 // loop_footer_branch
                %368 = sbr.rel target = $region95
              $region100: #{tpu_custom_call.1} parent=92 // loop_exit
                _
            $region93: #{tpu_custom_call.1} parent=77 // pred_fallthru
              _
          $region78: #{tpu_custom_call.1} parent=43 // pred_fallthru
            _
          // Predicated region
          $region79: #{tpu_custom_call.1} parent=43 // pred_check
            %p341 = pneg %p337
          $region80: #{tpu_custom_call.1} parent=43 // pred_check_branch
            %343 = sbr.rel (%p341) target = $region82
          $region81: #{tpu_custom_call.1} parent=43 // pred_region
            %s344 = sshll.u32 1, 1
            %s345 = ssub.s32 %s344, 1
            loop: start=0, step=1, limit=1
            $region83: #{tpu_custom_call.1} parent=81 // loop_pre_header
              _
            $region84: #{tpu_custom_call.1} parent=81 // loop_header
              %s347 = sphi 0, %s351
              %p348 = scmp.ge.s32.totalorder %s347, 1
              %s352 = sphi %s334, %s334
              %s353 = sphi %s335, %s335
            $region85: #{tpu_custom_call.1} parent=81 // loop_header_branch
              %350 = sbr.rel (%p348) target = $region89
            $region86: #{tpu_custom_call.1} parent=81 // loop_body
              %v354 = vld [vmem:[%s352] sm:%s345]
              %355 = vst [vmem:[%s353] sm:%s345] %v354
            $region87: #{tpu_custom_call.1} parent=81 // loop_footer
              %s351 = sadd.s32 1, %s347
            $region88: #{tpu_custom_call.1} parent=81 // loop_footer_branch
              %346 = sbr.rel target = $region84
            $region89: #{tpu_custom_call.1} parent=81 // loop_exit
              _
          $region82: #{tpu_custom_call.1} parent=43 // pred_fallthru
            _
          // Predicated region
          $region101: #{tpu_custom_call.1} parent=43 // pred_check
            _
          $region102: #{tpu_custom_call.1} parent=43 // pred_check_branch
            %380 = sbr.rel (0) target = $region104
          $region103: #{tpu_custom_call.1} parent=43 // pred_region
            %381 = vsyncadd %s283, 16
          $region104: #{tpu_custom_call.1} parent=43 // pred_fallthru
            _
          %s382 = sadd.s32 0, 2
          %s383 = sadd.s32 %s271, %s382
          %s384 = sld [smem:[#allocation5 + %s383]]
          %s385 = sadd.s32 %s277, %s382
          %s386 = scalar_lea.vmem %s6, %s384
          %s387 = scalar_lea.vmem [#allocation2], %s385
          %p389 = scmp.lt.u32.totalorder 1, 8
          %p390 = pneg %p389
          // Predicated region
          $region105: #{tpu_custom_call.1} parent=43 // pred_check
            _
          $region106: #{tpu_custom_call.1} parent=43 // pred_check_branch
            %392 = sbr.rel (%p389) target = $region108
          $region107: #{tpu_custom_call.1} parent=43 // pred_region
            %s408 = sand.u32 1, 7
            %p409 = scmp.eq.s32.totalorder %s408, 0
            %p410 = pneg %p409
            // Predicated region
            $region120: #{tpu_custom_call.1} parent=107 // pred_check
              _
            $region121: #{tpu_custom_call.1} parent=107 // pred_check_branch
              %412 = sbr.rel (%p409) target = $region123
            $region122: #{tpu_custom_call.1} parent=107 // pred_region
              %s413 = sand.u32 1, 7
              %s414 = ssub.s32 1, %s413
              %s415 = scalar_lea.vmem %s386, %s414
              %s416 = ssub.s32 1, %s413
              %s417 = scalar_lea.vmem %s387, %s416 [#allocation2]
              %s418 = sshll.u32 1, %s413
              %s419 = ssub.s32 %s418, 1
              loop: start=0, step=1, limit=1
              $region124: #{tpu_custom_call.1} parent=122 // loop_pre_header
                _
              $region125: #{tpu_custom_call.1} parent=122 // loop_header
                %s421 = sphi 0, %s425
                %p422 = scmp.ge.s32.totalorder %s421, 1
                %s426 = sphi %s415, %s415
                %s427 = sphi %s417, %s417
              $region126: #{tpu_custom_call.1} parent=122 // loop_header_branch
                %424 = sbr.rel (%p422) target = $region130
              $region127: #{tpu_custom_call.1} parent=122 // loop_body
                %v428 = vld [vmem:[%s426] sm:%s419]
                %429 = vst [vmem:[%s427] sm:%s419] %v428
              $region128: #{tpu_custom_call.1} parent=122 // loop_footer
                %s425 = sadd.s32 1, %s421
              $region129: #{tpu_custom_call.1} parent=122 // loop_footer_branch
                %420 = sbr.rel target = $region125
              $region130: #{tpu_custom_call.1} parent=122 // loop_exit
                _
            $region123: #{tpu_custom_call.1} parent=107 // pred_fallthru
              _
          $region108: #{tpu_custom_call.1} parent=43 // pred_fallthru
            _
          // Predicated region
          $region109: #{tpu_custom_call.1} parent=43 // pred_check
            %p393 = pneg %p389
          $region110: #{tpu_custom_call.1} parent=43 // pred_check_branch
            %395 = sbr.rel (%p393) target = $region112
          $region111: #{tpu_custom_call.1} parent=43 // pred_region
            %s396 = sshll.u32 1, 1
            %s397 = ssub.s32 %s396, 1
            loop: start=0, step=1, limit=1
            $region113: #{tpu_custom_call.1} parent=111 // loop_pre_header
              _
            $region114: #{tpu_custom_call.1} parent=111 // loop_header
              %s399 = sphi 0, %s403
              %p400 = scmp.ge.s32.totalorder %s399, 1
              %s404 = sphi %s386, %s386
              %s405 = sphi %s387, %s387
            $region115: #{tpu_custom_call.1} parent=111 // loop_header_branch
              %402 = sbr.rel (%p400) target = $region119
            $region116: #{tpu_custom_call.1} parent=111 // loop_body
              %v406 = vld [vmem:[%s404] sm:%s397]
              %407 = vst [vmem:[%s405] sm:%s397] %v406
            $region117: #{tpu_custom_call.1} parent=111 // loop_footer
              %s403 = sadd.s32 1, %s399
            $region118: #{tpu_custom_call.1} parent=111 // loop_footer_branch
              %398 = sbr.rel target = $region114
            $region119: #{tpu_custom_call.1} parent=111 // loop_exit
              _
          $region112: #{tpu_custom_call.1} parent=43 // pred_fallthru
            _
          // Predicated region
          $region131: #{tpu_custom_call.1} parent=43 // pred_check
            _
          $region132: #{tpu_custom_call.1} parent=43 // pred_check_branch
            %432 = sbr.rel (0) target = $region134
          $region133: #{tpu_custom_call.1} parent=43 // pred_region
            %433 = vsyncadd %s283, 16
          $region134: #{tpu_custom_call.1} parent=43 // pred_fallthru
            _
          %s434 = sadd.s32 0, 3
          %s435 = sadd.s32 %s271, %s434
          %s436 = sld [smem:[#allocation5 + %s435]]
          %s437 = sadd.s32 %s277, %s434
          %s438 = scalar_lea.vmem %s6, %s436
          %s439 = scalar_lea.vmem [#allocation2], %s437
          %p441 = scmp.lt.u32.totalorder 1, 8
          %p442 = pneg %p441
          // Predicated region
          $region135: #{tpu_custom_call.1} parent=43 // pred_check
            _
          $region136: #{tpu_custom_call.1} parent=43 // pred_check_branch
            %444 = sbr.rel (%p441) target = $region138
          $region137: #{tpu_custom_call.1} parent=43 // pred_region
            %s460 = sand.u32 1, 7
            %p461 = scmp.eq.s32.totalorder %s460, 0
            %p462 = pneg %p461
            // Predicated region
            $region150: #{tpu_custom_call.1} parent=137 // pred_check
              _
            $region151: #{tpu_custom_call.1} parent=137 // pred_check_branch
              %464 = sbr.rel (%p461) target = $region153
            $region152: #{tpu_custom_call.1} parent=137 // pred_region
              %s465 = sand.u32 1, 7
              %s466 = ssub.s32 1, %s465
              %s467 = scalar_lea.vmem %s438, %s466
              %s468 = ssub.s32 1, %s465
              %s469 = scalar_lea.vmem %s439, %s468 [#allocation2]
              %s470 = sshll.u32 1, %s465
              %s471 = ssub.s32 %s470, 1
              loop: start=0, step=1, limit=1
              $region154: #{tpu_custom_call.1} parent=152 // loop_pre_header
                _
              $region155: #{tpu_custom_call.1} parent=152 // loop_header
                %s473 = sphi 0, %s477
                %p474 = scmp.ge.s32.totalorder %s473, 1
                %s478 = sphi %s467, %s467
                %s479 = sphi %s469, %s469
              $region156: #{tpu_custom_call.1} parent=152 // loop_header_branch
                %476 = sbr.rel (%p474) target = $region160
              $region157: #{tpu_custom_call.1} parent=152 // loop_body
                %v480 = vld [vmem:[%s478] sm:%s471]
                %481 = vst [vmem:[%s479] sm:%s471] %v480
              $region158: #{tpu_custom_call.1} parent=152 // loop_footer
                %s477 = sadd.s32 1, %s473
              $region159: #{tpu_custom_call.1} parent=152 // loop_footer_branch
                %472 = sbr.rel target = $region155
              $region160: #{tpu_custom_call.1} parent=152 // loop_exit
                _
            $region153: #{tpu_custom_call.1} parent=137 // pred_fallthru
              _
          $region138: #{tpu_custom_call.1} parent=43 // pred_fallthru
            _
          // Predicated region
          $region139: #{tpu_custom_call.1} parent=43 // pred_check
            %p445 = pneg %p441
          $region140: #{tpu_custom_call.1} parent=43 // pred_check_branch
            %447 = sbr.rel (%p445) target = $region142
          $region141: #{tpu_custom_call.1} parent=43 // pred_region
            %s448 = sshll.u32 1, 1
            %s449 = ssub.s32 %s448, 1
            loop: start=0, step=1, limit=1
            $region143: #{tpu_custom_call.1} parent=141 // loop_pre_header
              _
            $region144: #{tpu_custom_call.1} parent=141 // loop_header
              %s451 = sphi 0, %s455
              %p452 = scmp.ge.s32.totalorder %s451, 1
              %s456 = sphi %s438, %s438
              %s457 = sphi %s439, %s439
            $region145: #{tpu_custom_call.1} parent=141 // loop_header_branch
              %454 = sbr.rel (%p452) target = $region149
            $region146: #{tpu_custom_call.1} parent=141 // loop_body
              %v458 = vld [vmem:[%s456] sm:%s449]
              %459 = vst [vmem:[%s457] sm:%s449] %v458
            $region147: #{tpu_custom_call.1} parent=141 // loop_footer
              %s455 = sadd.s32 1, %s451
            $region148: #{tpu_custom_call.1} parent=141 // loop_footer_branch
              %450 = sbr.rel target = $region144
            $region149: #{tpu_custom_call.1} parent=141 // loop_exit
              _
          $region142: #{tpu_custom_call.1} parent=43 // pred_fallthru
            _
          // Predicated region
          $region161: #{tpu_custom_call.1} parent=43 // pred_check
            _
          $region162: #{tpu_custom_call.1} parent=43 // pred_check_branch
            %484 = sbr.rel (0) target = $region164
          $region163: #{tpu_custom_call.1} parent=43 // pred_region
            %485 = vsyncadd %s283, 16
          $region164: #{tpu_custom_call.1} parent=43 // pred_fallthru
            _
          %s486 = sadd.s32 0, 4
          %s487 = sadd.s32 %s271, %s486
          %s488 = sld [smem:[#allocation5 + %s487]]
          %s489 = sadd.s32 %s277, %s486
          %s490 = scalar_lea.vmem %s6, %s488
          %s491 = scalar_lea.vmem [#allocation2], %s489
          %p493 = scmp.lt.u32.totalorder 1, 8
          %p494 = pneg %p493
          // Predicated region
          $region165: #{tpu_custom_call.1} parent=43 // pred_check
            _
          $region166: #{tpu_custom_call.1} parent=43 // pred_check_branch
            %496 = sbr.rel (%p493) target = $region168
          $region167: #{tpu_custom_call.1} parent=43 // pred_region
            %s512 = sand.u32 1, 7
            %p513 = scmp.eq.s32.totalorder %s512, 0
            %p514 = pneg %p513
            // Predicated region
            $region180: #{tpu_custom_call.1} parent=167 // pred_check
              _
            $region181: #{tpu_custom_call.1} parent=167 // pred_check_branch
              %516 = sbr.rel (%p513) target = $region183
            $region182: #{tpu_custom_call.1} parent=167 // pred_region
              %s517 = sand.u32 1, 7
              %s518 = ssub.s32 1, %s517
              %s519 = scalar_lea.vmem %s490, %s518
              %s520 = ssub.s32 1, %s517
              %s521 = scalar_lea.vmem %s491, %s520 [#allocation2]
              %s522 = sshll.u32 1, %s517
              %s523 = ssub.s32 %s522, 1
              loop: start=0, step=1, limit=1
              $region184: #{tpu_custom_call.1} parent=182 // loop_pre_header
                _
              $region185: #{tpu_custom_call.1} parent=182 // loop_header
                %s525 = sphi 0, %s529
                %p526 = scmp.ge.s32.totalorder %s525, 1
                %s530 = sphi %s519, %s519
                %s531 = sphi %s521, %s521
              $region186: #{tpu_custom_call.1} parent=182 // loop_header_branch
                %528 = sbr.rel (%p526) target = $region190
              $region187: #{tpu_custom_call.1} parent=182 // loop_body
                %v532 = vld [vmem:[%s530] sm:%s523]
                %533 = vst [vmem:[%s531] sm:%s523] %v532
              $region188: #{tpu_custom_call.1} parent=182 // loop_footer
                %s529 = sadd.s32 1, %s525
              $region189: #{tpu_custom_call.1} parent=182 // loop_footer_branch
                %524 = sbr.rel target = $region185
              $region190: #{tpu_custom_call.1} parent=182 // loop_exit
                _
            $region183: #{tpu_custom_call.1} parent=167 // pred_fallthru
              _
          $region168: #{tpu_custom_call.1} parent=43 // pred_fallthru
            _
          // Predicated region
          $region169: #{tpu_custom_call.1} parent=43 // pred_check
            %p497 = pneg %p493
          $region170: #{tpu_custom_call.1} parent=43 // pred_check_branch
            %499 = sbr.rel (%p497) target = $region172
          $region171: #{tpu_custom_call.1} parent=43 // pred_region
            %s500 = sshll.u32 1, 1
            %s501 = ssub.s32 %s500, 1
            loop: start=0, step=1, limit=1
            $region173: #{tpu_custom_call.1} parent=171 // loop_pre_header
              _
            $region174: #{tpu_custom_call.1} parent=171 // loop_header
              %s503 = sphi 0, %s507
              %p504 = scmp.ge.s32.totalorder %s503, 1
              %s508 = sphi %s490, %s490
              %s509 = sphi %s491, %s491
            $region175: #{tpu_custom_call.1} parent=171 // loop_header_branch
              %506 = sbr.rel (%p504) target = $region179
            $region176: #{tpu_custom_call.1} parent=171 // loop_body
              %v510 = vld [vmem:[%s508] sm:%s501]
              %511 = vst [vmem:[%s509] sm:%s501] %v510
            $region177: #{tpu_custom_call.1} parent=171 // loop_footer
              %s507 = sadd.s32 1, %s503
            $region178: #{tpu_custom_call.1} parent=171 // loop_footer_branch
              %502 = sbr.rel target = $region174
            $region179: #{tpu_custom_call.1} parent=171 // loop_exit
              _
          $region172: #{tpu_custom_call.1} parent=43 // pred_fallthru
            _
          // Predicated region
          $region191: #{tpu_custom_call.1} parent=43 // pred_check
            _
          $region192: #{tpu_custom_call.1} parent=43 // pred_check_branch
            %536 = sbr.rel (0) target = $region194
          $region193: #{tpu_custom_call.1} parent=43 // pred_region
            %537 = vsyncadd %s283, 16
          $region194: #{tpu_custom_call.1} parent=43 // pred_fallthru
            _
          %s538 = sadd.s32 0, 5
          %s539 = sadd.s32 %s271, %s538
          %s540 = sld [smem:[#allocation5 + %s539]]
          %s541 = sadd.s32 %s277, %s538
          %s542 = scalar_lea.vmem %s6, %s540
          %s543 = scalar_lea.vmem [#allocation2], %s541
          %p545 = scmp.lt.u32.totalorder 1, 8
          %p546 = pneg %p545
          // Predicated region
          $region195: #{tpu_custom_call.1} parent=43 // pred_check
            _
          $region196: #{tpu_custom_call.1} parent=43 // pred_check_branch
            %548 = sbr.rel (%p545) target = $region198
          $region197: #{tpu_custom_call.1} parent=43 // pred_region
            %s564 = sand.u32 1, 7
            %p565 = scmp.eq.s32.totalorder %s564, 0
            %p566 = pneg %p565
            // Predicated region
            $region210: #{tpu_custom_call.1} parent=197 // pred_check
              _
            $region211: #{tpu_custom_call.1} parent=197 // pred_check_branch
              %568 = sbr.rel (%p565) target = $region213
            $region212: #{tpu_custom_call.1} parent=197 // pred_region
              %s569 = sand.u32 1, 7
              %s570 = ssub.s32 1, %s569
              %s571 = scalar_lea.vmem %s542, %s570
              %s572 = ssub.s32 1, %s569
              %s573 = scalar_lea.vmem %s543, %s572 [#allocation2]
              %s574 = sshll.u32 1, %s569
              %s575 = ssub.s32 %s574, 1
              loop: start=0, step=1, limit=1
              $region214: #{tpu_custom_call.1} parent=212 // loop_pre_header
                _
              $region215: #{tpu_custom_call.1} parent=212 // loop_header
                %s577 = sphi 0, %s581
                %p578 = scmp.ge.s32.totalorder %s577, 1
                %s582 = sphi %s571, %s571
                %s583 = sphi %s573, %s573
              $region216: #{tpu_custom_call.1} parent=212 // loop_header_branch
                %580 = sbr.rel (%p578) target = $region220
              $region217: #{tpu_custom_call.1} parent=212 // loop_body
                %v584 = vld [vmem:[%s582] sm:%s575]
                %585 = vst [vmem:[%s583] sm:%s575] %v584
              $region218: #{tpu_custom_call.1} parent=212 // loop_footer
                %s581 = sadd.s32 1, %s577
              $region219: #{tpu_custom_call.1} parent=212 // loop_footer_branch
                %576 = sbr.rel target = $region215
              $region220: #{tpu_custom_call.1} parent=212 // loop_exit
                _
            $region213: #{tpu_custom_call.1} parent=197 // pred_fallthru
              _
          $region198: #{tpu_custom_call.1} parent=43 // pred_fallthru
            _
          // Predicated region
          $region199: #{tpu_custom_call.1} parent=43 // pred_check
            %p549 = pneg %p545
          $region200: #{tpu_custom_call.1} parent=43 // pred_check_branch
            %551 = sbr.rel (%p549) target = $region202
          $region201: #{tpu_custom_call.1} parent=43 // pred_region
            %s552 = sshll.u32 1, 1
            %s553 = ssub.s32 %s552, 1
            loop: start=0, step=1, limit=1
            $region203: #{tpu_custom_call.1} parent=201 // loop_pre_header
              _
            $region204: #{tpu_custom_call.1} parent=201 // loop_header
              %s555 = sphi 0, %s559
              %p556 = scmp.ge.s32.totalorder %s555, 1
              %s560 = sphi %s542, %s542
              %s561 = sphi %s543, %s543
            $region205: #{tpu_custom_call.1} parent=201 // loop_header_branch
              %558 = sbr.rel (%p556) target = $region209
            $region206: #{tpu_custom_call.1} parent=201 // loop_body
              %v562 = vld [vmem:[%s560] sm:%s553]
              %563 = vst [vmem:[%s561] sm:%s553] %v562
            $region207: #{tpu_custom_call.1} parent=201 // loop_footer
              %s559 = sadd.s32 1, %s555
            $region208: #{tpu_custom_call.1} parent=201 // loop_footer_branch
              %554 = sbr.rel target = $region204
            $region209: #{tpu_custom_call.1} parent=201 // loop_exit
              _
          $region202: #{tpu_custom_call.1} parent=43 // pred_fallthru
            _
          // Predicated region
          $region221: #{tpu_custom_call.1} parent=43 // pred_check
            _
          $region222: #{tpu_custom_call.1} parent=43 // pred_check_branch
            %588 = sbr.rel (0) target = $region224
          $region223: #{tpu_custom_call.1} parent=43 // pred_region
            %589 = vsyncadd %s283, 16
          $region224: #{tpu_custom_call.1} parent=43 // pred_fallthru
            _
          %s590 = sadd.s32 0, 6
          %s591 = sadd.s32 %s271, %s590
          %s592 = sld [smem:[#allocation5 + %s591]]
          %s593 = sadd.s32 %s277, %s590
          %s594 = scalar_lea.vmem %s6, %s592
          %s595 = scalar_lea.vmem [#allocation2], %s593
          %p597 = scmp.lt.u32.totalorder 1, 8
          %p598 = pneg %p597
          // Predicated region
          $region225: #{tpu_custom_call.1} parent=43 // pred_check
            _
          $region226: #{tpu_custom_call.1} parent=43 // pred_check_branch
            %600 = sbr.rel (%p597) target = $region228
          $region227: #{tpu_custom_call.1} parent=43 // pred_region
            %s616 = sand.u32 1, 7
            %p617 = scmp.eq.s32.totalorder %s616, 0
            %p618 = pneg %p617
            // Predicated region
            $region240: #{tpu_custom_call.1} parent=227 // pred_check
              _
            $region241: #{tpu_custom_call.1} parent=227 // pred_check_branch
              %620 = sbr.rel (%p617) target = $region243
            $region242: #{tpu_custom_call.1} parent=227 // pred_region
              %s621 = sand.u32 1, 7
              %s622 = ssub.s32 1, %s621
              %s623 = scalar_lea.vmem %s594, %s622
              %s624 = ssub.s32 1, %s621
              %s625 = scalar_lea.vmem %s595, %s624 [#allocation2]
              %s626 = sshll.u32 1, %s621
              %s627 = ssub.s32 %s626, 1
              loop: start=0, step=1, limit=1
              $region244: #{tpu_custom_call.1} parent=242 // loop_pre_header
                _
              $region245: #{tpu_custom_call.1} parent=242 // loop_header
                %s629 = sphi 0, %s633
                %p630 = scmp.ge.s32.totalorder %s629, 1
                %s634 = sphi %s623, %s623
                %s635 = sphi %s625, %s625
              $region246: #{tpu_custom_call.1} parent=242 // loop_header_branch
                %632 = sbr.rel (%p630) target = $region250
              $region247: #{tpu_custom_call.1} parent=242 // loop_body
                %v636 = vld [vmem:[%s634] sm:%s627]
                %637 = vst [vmem:[%s635] sm:%s627] %v636
              $region248: #{tpu_custom_call.1} parent=242 // loop_footer
                %s633 = sadd.s32 1, %s629
              $region249: #{tpu_custom_call.1} parent=242 // loop_footer_branch
                %628 = sbr.rel target = $region245
              $region250: #{tpu_custom_call.1} parent=242 // loop_exit
                _
            $region243: #{tpu_custom_call.1} parent=227 // pred_fallthru
              _
          $region228: #{tpu_custom_call.1} parent=43 // pred_fallthru
            _
          // Predicated region
          $region229: #{tpu_custom_call.1} parent=43 // pred_check
            %p601 = pneg %p597
          $region230: #{tpu_custom_call.1} parent=43 // pred_check_branch
            %603 = sbr.rel (%p601) target = $region232
          $region231: #{tpu_custom_call.1} parent=43 // pred_region
            %s604 = sshll.u32 1, 1
            %s605 = ssub.s32 %s604, 1
            loop: start=0, step=1, limit=1
            $region233: #{tpu_custom_call.1} parent=231 // loop_pre_header
              _
            $region234: #{tpu_custom_call.1} parent=231 // loop_header
              %s607 = sphi 0, %s611
              %p608 = scmp.ge.s32.totalorder %s607, 1
              %s612 = sphi %s594, %s594
              %s613 = sphi %s595, %s595
            $region235: #{tpu_custom_call.1} parent=231 // loop_header_branch
              %610 = sbr.rel (%p608) target = $region239
            $region236: #{tpu_custom_call.1} parent=231 // loop_body
              %v614 = vld [vmem:[%s612] sm:%s605]
              %615 = vst [vmem:[%s613] sm:%s605] %v614
            $region237: #{tpu_custom_call.1} parent=231 // loop_footer
              %s611 = sadd.s32 1, %s607
            $region238: #{tpu_custom_call.1} parent=231 // loop_footer_branch
              %606 = sbr.rel target = $region234
            $region239: #{tpu_custom_call.1} parent=231 // loop_exit
              _
          $region232: #{tpu_custom_call.1} parent=43 // pred_fallthru
            _
          // Predicated region
          $region251: #{tpu_custom_call.1} parent=43 // pred_check
            _
          $region252: #{tpu_custom_call.1} parent=43 // pred_check_branch
            %640 = sbr.rel (0) target = $region254
          $region253: #{tpu_custom_call.1} parent=43 // pred_region
            %641 = vsyncadd %s283, 16
          $region254: #{tpu_custom_call.1} parent=43 // pred_fallthru
            _
          %s642 = sadd.s32 0, 7
          %s643 = sadd.s32 %s271, %s642
          %s644 = sld [smem:[#allocation5 + %s643]]
          %s645 = sadd.s32 %s277, %s642
          %s646 = scalar_lea.vmem %s6, %s644
          %s647 = scalar_lea.vmem [#allocation2], %s645
          %p649 = scmp.lt.u32.totalorder 1, 8
          %p650 = pneg %p649
          // Predicated region
          $region255: #{tpu_custom_call.1} parent=43 // pred_check
            _
          $region256: #{tpu_custom_call.1} parent=43 // pred_check_branch
            %652 = sbr.rel (%p649) target = $region258
          $region257: #{tpu_custom_call.1} parent=43 // pred_region
            %s668 = sand.u32 1, 7
            %p669 = scmp.eq.s32.totalorder %s668, 0
            %p670 = pneg %p669
            // Predicated region
            $region270: #{tpu_custom_call.1} parent=257 // pred_check
              _
            $region271: #{tpu_custom_call.1} parent=257 // pred_check_branch
              %672 = sbr.rel (%p669) target = $region273
            $region272: #{tpu_custom_call.1} parent=257 // pred_region
              %s673 = sand.u32 1, 7
              %s674 = ssub.s32 1, %s673
              %s675 = scalar_lea.vmem %s646, %s674
              %s676 = ssub.s32 1, %s673
              %s677 = scalar_lea.vmem %s647, %s676 [#allocation2]
              %s678 = sshll.u32 1, %s673
              %s679 = ssub.s32 %s678, 1
              loop: start=0, step=1, limit=1
              $region274: #{tpu_custom_call.1} parent=272 // loop_pre_header
                _
              $region275: #{tpu_custom_call.1} parent=272 // loop_header
                %s681 = sphi 0, %s685
                %p682 = scmp.ge.s32.totalorder %s681, 1
                %s686 = sphi %s675, %s675
                %s687 = sphi %s677, %s677
              $region276: #{tpu_custom_call.1} parent=272 // loop_header_branch
                %684 = sbr.rel (%p682) target = $region280
              $region277: #{tpu_custom_call.1} parent=272 // loop_body
                %v688 = vld [vmem:[%s686] sm:%s679]
                %689 = vst [vmem:[%s687] sm:%s679] %v688
              $region278: #{tpu_custom_call.1} parent=272 // loop_footer
                %s685 = sadd.s32 1, %s681
              $region279: #{tpu_custom_call.1} parent=272 // loop_footer_branch
                %680 = sbr.rel target = $region275
              $region280: #{tpu_custom_call.1} parent=272 // loop_exit
                _
            $region273: #{tpu_custom_call.1} parent=257 // pred_fallthru
              _
          $region258: #{tpu_custom_call.1} parent=43 // pred_fallthru
            _
          // Predicated region
          $region259: #{tpu_custom_call.1} parent=43 // pred_check
            %p653 = pneg %p649
          $region260: #{tpu_custom_call.1} parent=43 // pred_check_branch
            %655 = sbr.rel (%p653) target = $region262
          $region261: #{tpu_custom_call.1} parent=43 // pred_region
            %s656 = sshll.u32 1, 1
            %s657 = ssub.s32 %s656, 1
            loop: start=0, step=1, limit=1
            $region263: #{tpu_custom_call.1} parent=261 // loop_pre_header
              _
            $region264: #{tpu_custom_call.1} parent=261 // loop_header
              %s659 = sphi 0, %s663
              %p660 = scmp.ge.s32.totalorder %s659, 1
              %s664 = sphi %s646, %s646
              %s665 = sphi %s647, %s647
            $region265: #{tpu_custom_call.1} parent=261 // loop_header_branch
              %662 = sbr.rel (%p660) target = $region269
            $region266: #{tpu_custom_call.1} parent=261 // loop_body
              %v666 = vld [vmem:[%s664] sm:%s657]
              %667 = vst [vmem:[%s665] sm:%s657] %v666
            $region267: #{tpu_custom_call.1} parent=261 // loop_footer
              %s663 = sadd.s32 1, %s659
            $region268: #{tpu_custom_call.1} parent=261 // loop_footer_branch
              %658 = sbr.rel target = $region264
            $region269: #{tpu_custom_call.1} parent=261 // loop_exit
              _
          $region262: #{tpu_custom_call.1} parent=43 // pred_fallthru
            _
          // Predicated region
          $region281: #{tpu_custom_call.1} parent=43 // pred_check
            _
          $region282: #{tpu_custom_call.1} parent=43 // pred_check_branch
            %692 = sbr.rel (0) target = $region284
          $region283: #{tpu_custom_call.1} parent=43 // pred_region
            %693 = vsyncadd %s283, 16
          $region284: #{tpu_custom_call.1} parent=43 // pred_fallthru
            _
        $region44: #{tpu_custom_call.1} parent=39 // pred_fallthru
          _
        %s694 = sadd.s32 %s32, 1
        %p695 = scmp.lt.s32.totalorder %s694, 1
        // Predicated region
        $region285: #{tpu_custom_call.1} parent=39 // pred_check
          %p696 = pneg %p695
        $region286: #{tpu_custom_call.1} parent=39 // pred_check_branch
          %698 = sbr.rel (%p696) target = $region288
        $region287: #{tpu_custom_call.1} parent=39 // pred_region
          %s699 = sadd.s32 %s271, 8
          %s700 = ssub.s32 1, %s272
          %s701 = smul.u32 %s700, 8
          %s702 = sadd.s32 %s699, 0
          %s703 = sld [smem:[#allocation5 + %s702]]
          %s704 = sadd.s32 %s701, 0
          %s705 = scalar_lea.vmem %s6, %s703
          %s706 = scalar_lea.vmem [#allocation2], %s704
          %s707 = scalar_lea.sflag [#allocation3], %s700
          %p709 = scmp.lt.u32.totalorder 1, 8
          %p710 = pneg %p709
          // Predicated region
          $region289: #{tpu_custom_call.1} parent=287 // pred_check
            _
          $region290: #{tpu_custom_call.1} parent=287 // pred_check_branch
            %712 = sbr.rel (%p709) target = $region292
          $region291: #{tpu_custom_call.1} parent=287 // pred_region
            %s728 = sand.u32 1, 7
            %p729 = scmp.eq.s32.totalorder %s728, 0
            %p730 = pneg %p729
            // Predicated region
            $region304: #{tpu_custom_call.1} parent=291 // pred_check
              _
            $region305: #{tpu_custom_call.1} parent=291 // pred_check_branch
              %732 = sbr.rel (%p729) target = $region307
            $region306: #{tpu_custom_call.1} parent=291 // pred_region
              %s733 = sand.u32 1, 7
              %s734 = ssub.s32 1, %s733
              %s735 = scalar_lea.vmem %s705, %s734
              %s736 = ssub.s32 1, %s733
              %s737 = scalar_lea.vmem %s706, %s736 [#allocation2]
              %s738 = sshll.u32 1, %s733
              %s739 = ssub.s32 %s738, 1
              loop: start=0, step=1, limit=1
              $region308: #{tpu_custom_call.1} parent=306 // loop_pre_header
                _
              $region309: #{tpu_custom_call.1} parent=306 // loop_header
                %s741 = sphi 0, %s745
                %p742 = scmp.ge.s32.totalorder %s741, 1
                %s746 = sphi %s735, %s735
                %s747 = sphi %s737, %s737
              $region310: #{tpu_custom_call.1} parent=306 // loop_header_branch
                %744 = sbr.rel (%p742) target = $region314
              $region311: #{tpu_custom_call.1} parent=306 // loop_body
                %v748 = vld [vmem:[%s746] sm:%s739]
                %749 = vst [vmem:[%s747] sm:%s739] %v748
              $region312: #{tpu_custom_call.1} parent=306 // loop_footer
                %s745 = sadd.s32 1, %s741
              $region313: #{tpu_custom_call.1} parent=306 // loop_footer_branch
                %740 = sbr.rel target = $region309
              $region314: #{tpu_custom_call.1} parent=306 // loop_exit
                _
            $region307: #{tpu_custom_call.1} parent=291 // pred_fallthru
              _
          $region292: #{tpu_custom_call.1} parent=287 // pred_fallthru
            _
          // Predicated region
          $region293: #{tpu_custom_call.1} parent=287 // pred_check
            %p713 = pneg %p709
          $region294: #{tpu_custom_call.1} parent=287 // pred_check_branch
            %715 = sbr.rel (%p713) target = $region296
          $region295: #{tpu_custom_call.1} parent=287 // pred_region
            %s716 = sshll.u32 1, 1
            %s717 = ssub.s32 %s716, 1
            loop: start=0, step=1, limit=1
            $region297: #{tpu_custom_call.1} parent=295 // loop_pre_header
              _
            $region298: #{tpu_custom_call.1} parent=295 // loop_header
              %s719 = sphi 0, %s723
              %p720 = scmp.ge.s32.totalorder %s719, 1
              %s724 = sphi %s705, %s705
              %s725 = sphi %s706, %s706
            $region299: #{tpu_custom_call.1} parent=295 // loop_header_branch
              %722 = sbr.rel (%p720) target = $region303
            $region300: #{tpu_custom_call.1} parent=295 // loop_body
              %v726 = vld [vmem:[%s724] sm:%s717]
              %727 = vst [vmem:[%s725] sm:%s717] %v726
            $region301: #{tpu_custom_call.1} parent=295 // loop_footer
              %s723 = sadd.s32 1, %s719
            $region302: #{tpu_custom_call.1} parent=295 // loop_footer_branch
              %718 = sbr.rel target = $region298
            $region303: #{tpu_custom_call.1} parent=295 // loop_exit
              _
          $region296: #{tpu_custom_call.1} parent=287 // pred_fallthru
            _
          // Predicated region
          $region315: #{tpu_custom_call.1} parent=287 // pred_check
            _
          $region316: #{tpu_custom_call.1} parent=287 // pred_check_branch
            %752 = sbr.rel (0) target = $region318
          $region317: #{tpu_custom_call.1} parent=287 // pred_region
            %753 = vsyncadd %s707, 16
          $region318: #{tpu_custom_call.1} parent=287 // pred_fallthru
            _
          %s754 = sadd.s32 0, 1
          %s755 = sadd.s32 %s699, %s754
          %s756 = sld [smem:[#allocation5 + %s755]]
          %s757 = sadd.s32 %s701, %s754
          %s758 = scalar_lea.vmem %s6, %s756
          %s759 = scalar_lea.vmem [#allocation2], %s757
          %p761 = scmp.lt.u32.totalorder 1, 8
          %p762 = pneg %p761
          // Predicated region
          $region319: #{tpu_custom_call.1} parent=287 // pred_check
            _
          $region320: #{tpu_custom_call.1} parent=287 // pred_check_branch
            %764 = sbr.rel (%p761) target = $region322
          $region321: #{tpu_custom_call.1} parent=287 // pred_region
            %s780 = sand.u32 1, 7
            %p781 = scmp.eq.s32.totalorder %s780, 0
            %p782 = pneg %p781
            // Predicated region
            $region334: #{tpu_custom_call.1} parent=321 // pred_check
              _
            $region335: #{tpu_custom_call.1} parent=321 // pred_check_branch
              %784 = sbr.rel (%p781) target = $region337
            $region336: #{tpu_custom_call.1} parent=321 // pred_region
              %s785 = sand.u32 1, 7
              %s786 = ssub.s32 1, %s785
              %s787 = scalar_lea.vmem %s758, %s786
              %s788 = ssub.s32 1, %s785
              %s789 = scalar_lea.vmem %s759, %s788 [#allocation2]
              %s790 = sshll.u32 1, %s785
              %s791 = ssub.s32 %s790, 1
              loop: start=0, step=1, limit=1
              $region338: #{tpu_custom_call.1} parent=336 // loop_pre_header
                _
              $region339: #{tpu_custom_call.1} parent=336 // loop_header
                %s793 = sphi 0, %s797
                %p794 = scmp.ge.s32.totalorder %s793, 1
                %s798 = sphi %s787, %s787
                %s799 = sphi %s789, %s789
              $region340: #{tpu_custom_call.1} parent=336 // loop_header_branch
                %796 = sbr.rel (%p794) target = $region344
              $region341: #{tpu_custom_call.1} parent=336 // loop_body
                %v800 = vld [vmem:[%s798] sm:%s791]
                %801 = vst [vmem:[%s799] sm:%s791] %v800
              $region342: #{tpu_custom_call.1} parent=336 // loop_footer
                %s797 = sadd.s32 1, %s793
              $region343: #{tpu_custom_call.1} parent=336 // loop_footer_branch
                %792 = sbr.rel target = $region339
              $region344: #{tpu_custom_call.1} parent=336 // loop_exit
                _
            $region337: #{tpu_custom_call.1} parent=321 // pred_fallthru
              _
          $region322: #{tpu_custom_call.1} parent=287 // pred_fallthru
            _
          // Predicated region
          $region323: #{tpu_custom_call.1} parent=287 // pred_check
            %p765 = pneg %p761
          $region324: #{tpu_custom_call.1} parent=287 // pred_check_branch
            %767 = sbr.rel (%p765) target = $region326
          $region325: #{tpu_custom_call.1} parent=287 // pred_region
            %s768 = sshll.u32 1, 1
            %s769 = ssub.s32 %s768, 1
            loop: start=0, step=1, limit=1
            $region327: #{tpu_custom_call.1} parent=325 // loop_pre_header
              _
            $region328: #{tpu_custom_call.1} parent=325 // loop_header
              %s771 = sphi 0, %s775
              %p772 = scmp.ge.s32.totalorder %s771, 1
              %s776 = sphi %s758, %s758
              %s777 = sphi %s759, %s759
            $region329: #{tpu_custom_call.1} parent=325 // loop_header_branch
              %774 = sbr.rel (%p772) target = $region333
            $region330: #{tpu_custom_call.1} parent=325 // loop_body
              %v778 = vld [vmem:[%s776] sm:%s769]
              %779 = vst [vmem:[%s777] sm:%s769] %v778
            $region331: #{tpu_custom_call.1} parent=325 // loop_footer
              %s775 = sadd.s32 1, %s771
            $region332: #{tpu_custom_call.1} parent=325 // loop_footer_branch
              %770 = sbr.rel target = $region328
            $region333: #{tpu_custom_call.1} parent=325 // loop_exit
              _
          $region326: #{tpu_custom_call.1} parent=287 // pred_fallthru
            _
          // Predicated region
          $region345: #{tpu_custom_call.1} parent=287 // pred_check
            _
          $region346: #{tpu_custom_call.1} parent=287 // pred_check_branch
            %804 = sbr.rel (0) target = $region348
          $region347: #{tpu_custom_call.1} parent=287 // pred_region
            %805 = vsyncadd %s707, 16
          $region348: #{tpu_custom_call.1} parent=287 // pred_fallthru
            _
          %s806 = sadd.s32 0, 2
          %s807 = sadd.s32 %s699, %s806
          %s808 = sld [smem:[#allocation5 + %s807]]
          %s809 = sadd.s32 %s701, %s806
          %s810 = scalar_lea.vmem %s6, %s808
          %s811 = scalar_lea.vmem [#allocation2], %s809
          %p813 = scmp.lt.u32.totalorder 1, 8
          %p814 = pneg %p813
          // Predicated region
          $region349: #{tpu_custom_call.1} parent=287 // pred_check
            _
          $region350: #{tpu_custom_call.1} parent=287 // pred_check_branch
            %816 = sbr.rel (%p813) target = $region352
          $region351: #{tpu_custom_call.1} parent=287 // pred_region
            %s832 = sand.u32 1, 7
            %p833 = scmp.eq.s32.totalorder %s832, 0
            %p834 = pneg %p833
            // Predicated region
            $region364: #{tpu_custom_call.1} parent=351 // pred_check
              _
            $region365: #{tpu_custom_call.1} parent=351 // pred_check_branch
              %836 = sbr.rel (%p833) target = $region367
            $region366: #{tpu_custom_call.1} parent=351 // pred_region
              %s837 = sand.u32 1, 7
              %s838 = ssub.s32 1, %s837
              %s839 = scalar_lea.vmem %s810, %s838
              %s840 = ssub.s32 1, %s837
              %s841 = scalar_lea.vmem %s811, %s840 [#allocation2]
              %s842 = sshll.u32 1, %s837
              %s843 = ssub.s32 %s842, 1
              loop: start=0, step=1, limit=1
              $region368: #{tpu_custom_call.1} parent=366 // loop_pre_header
                _
              $region369: #{tpu_custom_call.1} parent=366 // loop_header
                %s845 = sphi 0, %s849
                %p846 = scmp.ge.s32.totalorder %s845, 1
                %s850 = sphi %s839, %s839
                %s851 = sphi %s841, %s841
              $region370: #{tpu_custom_call.1} parent=366 // loop_header_branch
                %848 = sbr.rel (%p846) target = $region374
              $region371: #{tpu_custom_call.1} parent=366 // loop_body
                %v852 = vld [vmem:[%s850] sm:%s843]
                %853 = vst [vmem:[%s851] sm:%s843] %v852
              $region372: #{tpu_custom_call.1} parent=366 // loop_footer
                %s849 = sadd.s32 1, %s845
              $region373: #{tpu_custom_call.1} parent=366 // loop_footer_branch
                %844 = sbr.rel target = $region369
              $region374: #{tpu_custom_call.1} parent=366 // loop_exit
                _
            $region367: #{tpu_custom_call.1} parent=351 // pred_fallthru
              _
          $region352: #{tpu_custom_call.1} parent=287 // pred_fallthru
            _
          // Predicated region
          $region353: #{tpu_custom_call.1} parent=287 // pred_check
            %p817 = pneg %p813
          $region354: #{tpu_custom_call.1} parent=287 // pred_check_branch
            %819 = sbr.rel (%p817) target = $region356
          $region355: #{tpu_custom_call.1} parent=287 // pred_region
            %s820 = sshll.u32 1, 1
            %s821 = ssub.s32 %s820, 1
            loop: start=0, step=1, limit=1
            $region357: #{tpu_custom_call.1} parent=355 // loop_pre_header
              _
            $region358: #{tpu_custom_call.1} parent=355 // loop_header
              %s823 = sphi 0, %s827
              %p824 = scmp.ge.s32.totalorder %s823, 1
              %s828 = sphi %s810, %s810
              %s829 = sphi %s811, %s811
            $region359: #{tpu_custom_call.1} parent=355 // loop_header_branch
              %826 = sbr.rel (%p824) target = $region363
            $region360: #{tpu_custom_call.1} parent=355 // loop_body
              %v830 = vld [vmem:[%s828] sm:%s821]
              %831 = vst [vmem:[%s829] sm:%s821] %v830
            $region361: #{tpu_custom_call.1} parent=355 // loop_footer
              %s827 = sadd.s32 1, %s823
            $region362: #{tpu_custom_call.1} parent=355 // loop_footer_branch
              %822 = sbr.rel target = $region358
            $region363: #{tpu_custom_call.1} parent=355 // loop_exit
              _
          $region356: #{tpu_custom_call.1} parent=287 // pred_fallthru
            _
          // Predicated region
          $region375: #{tpu_custom_call.1} parent=287 // pred_check
            _
          $region376: #{tpu_custom_call.1} parent=287 // pred_check_branch
            %856 = sbr.rel (0) target = $region378
          $region377: #{tpu_custom_call.1} parent=287 // pred_region
            %857 = vsyncadd %s707, 16
          $region378: #{tpu_custom_call.1} parent=287 // pred_fallthru
            _
          %s858 = sadd.s32 0, 3
          %s859 = sadd.s32 %s699, %s858
          %s860 = sld [smem:[#allocation5 + %s859]]
          %s861 = sadd.s32 %s701, %s858
          %s862 = scalar_lea.vmem %s6, %s860
          %s863 = scalar_lea.vmem [#allocation2], %s861
          %p865 = scmp.lt.u32.totalorder 1, 8
          %p866 = pneg %p865
          // Predicated region
          $region379: #{tpu_custom_call.1} parent=287 // pred_check
            _
          $region380: #{tpu_custom_call.1} parent=287 // pred_check_branch
            %868 = sbr.rel (%p865) target = $region382
          $region381: #{tpu_custom_call.1} parent=287 // pred_region
            %s884 = sand.u32 1, 7
            %p885 = scmp.eq.s32.totalorder %s884, 0
            %p886 = pneg %p885
            // Predicated region
            $region394: #{tpu_custom_call.1} parent=381 // pred_check
              _
            $region395: #{tpu_custom_call.1} parent=381 // pred_check_branch
              %888 = sbr.rel (%p885) target = $region397
            $region396: #{tpu_custom_call.1} parent=381 // pred_region
              %s889 = sand.u32 1, 7
              %s890 = ssub.s32 1, %s889
              %s891 = scalar_lea.vmem %s862, %s890
              %s892 = ssub.s32 1, %s889
              %s893 = scalar_lea.vmem %s863, %s892 [#allocation2]
              %s894 = sshll.u32 1, %s889
              %s895 = ssub.s32 %s894, 1
              loop: start=0, step=1, limit=1
              $region398: #{tpu_custom_call.1} parent=396 // loop_pre_header
                _
              $region399: #{tpu_custom_call.1} parent=396 // loop_header
                %s897 = sphi 0, %s901
                %p898 = scmp.ge.s32.totalorder %s897, 1
                %s902 = sphi %s891, %s891
                %s903 = sphi %s893, %s893
              $region400: #{tpu_custom_call.1} parent=396 // loop_header_branch
                %900 = sbr.rel (%p898) target = $region404
              $region401: #{tpu_custom_call.1} parent=396 // loop_body
                %v904 = vld [vmem:[%s902] sm:%s895]
                %905 = vst [vmem:[%s903] sm:%s895] %v904
              $region402: #{tpu_custom_call.1} parent=396 // loop_footer
                %s901 = sadd.s32 1, %s897
              $region403: #{tpu_custom_call.1} parent=396 // loop_footer_branch
                %896 = sbr.rel target = $region399
              $region404: #{tpu_custom_call.1} parent=396 // loop_exit
                _
            $region397: #{tpu_custom_call.1} parent=381 // pred_fallthru
              _
          $region382: #{tpu_custom_call.1} parent=287 // pred_fallthru
            _
          // Predicated region
          $region383: #{tpu_custom_call.1} parent=287 // pred_check
            %p869 = pneg %p865
          $region384: #{tpu_custom_call.1} parent=287 // pred_check_branch
            %871 = sbr.rel (%p869) target = $region386
          $region385: #{tpu_custom_call.1} parent=287 // pred_region
            %s872 = sshll.u32 1, 1
            %s873 = ssub.s32 %s872, 1
            loop: start=0, step=1, limit=1
            $region387: #{tpu_custom_call.1} parent=385 // loop_pre_header
              _
            $region388: #{tpu_custom_call.1} parent=385 // loop_header
              %s875 = sphi 0, %s879
              %p876 = scmp.ge.s32.totalorder %s875, 1
              %s880 = sphi %s862, %s862
              %s881 = sphi %s863, %s863
            $region389: #{tpu_custom_call.1} parent=385 // loop_header_branch
              %878 = sbr.rel (%p876) target = $region393
            $region390: #{tpu_custom_call.1} parent=385 // loop_body
              %v882 = vld [vmem:[%s880] sm:%s873]
              %883 = vst [vmem:[%s881] sm:%s873] %v882
            $region391: #{tpu_custom_call.1} parent=385 // loop_footer
              %s879 = sadd.s32 1, %s875
            $region392: #{tpu_custom_call.1} parent=385 // loop_footer_branch
              %874 = sbr.rel target = $region388
            $region393: #{tpu_custom_call.1} parent=385 // loop_exit
              _
          $region386: #{tpu_custom_call.1} parent=287 // pred_fallthru
            _
          // Predicated region
          $region405: #{tpu_custom_call.1} parent=287 // pred_check
            _
          $region406: #{tpu_custom_call.1} parent=287 // pred_check_branch
            %908 = sbr.rel (0) target = $region408
          $region407: #{tpu_custom_call.1} parent=287 // pred_region
            %909 = vsyncadd %s707, 16
          $region408: #{tpu_custom_call.1} parent=287 // pred_fallthru
            _
          %s910 = sadd.s32 0, 4
          %s911 = sadd.s32 %s699, %s910
          %s912 = sld [smem:[#allocation5 + %s911]]
          %s913 = sadd.s32 %s701, %s910
          %s914 = scalar_lea.vmem %s6, %s912
          %s915 = scalar_lea.vmem [#allocation2], %s913
          %p917 = scmp.lt.u32.totalorder 1, 8
          %p918 = pneg %p917
          // Predicated region
          $region409: #{tpu_custom_call.1} parent=287 // pred_check
            _
          $region410: #{tpu_custom_call.1} parent=287 // pred_check_branch
            %920 = sbr.rel (%p917) target = $region412
          $region411: #{tpu_custom_call.1} parent=287 // pred_region
            %s936 = sand.u32 1, 7
            %p937 = scmp.eq.s32.totalorder %s936, 0
            %p938 = pneg %p937
            // Predicated region
            $region424: #{tpu_custom_call.1} parent=411 // pred_check
              _
            $region425: #{tpu_custom_call.1} parent=411 // pred_check_branch
              %940 = sbr.rel (%p937) target = $region427
            $region426: #{tpu_custom_call.1} parent=411 // pred_region
              %s941 = sand.u32 1, 7
              %s942 = ssub.s32 1, %s941
              %s943 = scalar_lea.vmem %s914, %s942
              %s944 = ssub.s32 1, %s941
              %s945 = scalar_lea.vmem %s915, %s944 [#allocation2]
              %s946 = sshll.u32 1, %s941
              %s947 = ssub.s32 %s946, 1
              loop: start=0, step=1, limit=1
              $region428: #{tpu_custom_call.1} parent=426 // loop_pre_header
                _
              $region429: #{tpu_custom_call.1} parent=426 // loop_header
                %s949 = sphi 0, %s953
                %p950 = scmp.ge.s32.totalorder %s949, 1
                %s954 = sphi %s943, %s943
                %s955 = sphi %s945, %s945
              $region430: #{tpu_custom_call.1} parent=426 // loop_header_branch
                %952 = sbr.rel (%p950) target = $region434
              $region431: #{tpu_custom_call.1} parent=426 // loop_body
                %v956 = vld [vmem:[%s954] sm:%s947]
                %957 = vst [vmem:[%s955] sm:%s947] %v956
              $region432: #{tpu_custom_call.1} parent=426 // loop_footer
                %s953 = sadd.s32 1, %s949
              $region433: #{tpu_custom_call.1} parent=426 // loop_footer_branch
                %948 = sbr.rel target = $region429
              $region434: #{tpu_custom_call.1} parent=426 // loop_exit
                _
            $region427: #{tpu_custom_call.1} parent=411 // pred_fallthru
              _
          $region412: #{tpu_custom_call.1} parent=287 // pred_fallthru
            _
          // Predicated region
          $region413: #{tpu_custom_call.1} parent=287 // pred_check
            %p921 = pneg %p917
          $region414: #{tpu_custom_call.1} parent=287 // pred_check_branch
            %923 = sbr.rel (%p921) target = $region416
          $region415: #{tpu_custom_call.1} parent=287 // pred_region
            %s924 = sshll.u32 1, 1
            %s925 = ssub.s32 %s924, 1
            loop: start=0, step=1, limit=1
            $region417: #{tpu_custom_call.1} parent=415 // loop_pre_header
              _
            $region418: #{tpu_custom_call.1} parent=415 // loop_header
              %s927 = sphi 0, %s931
              %p928 = scmp.ge.s32.totalorder %s927, 1
              %s932 = sphi %s914, %s914
              %s933 = sphi %s915, %s915
            $region419: #{tpu_custom_call.1} parent=415 // loop_header_branch
              %930 = sbr.rel (%p928) target = $region423
            $region420: #{tpu_custom_call.1} parent=415 // loop_body
              %v934 = vld [vmem:[%s932] sm:%s925]
              %935 = vst [vmem:[%s933] sm:%s925] %v934
            $region421: #{tpu_custom_call.1} parent=415 // loop_footer
              %s931 = sadd.s32 1, %s927
            $region422: #{tpu_custom_call.1} parent=415 // loop_footer_branch
              %926 = sbr.rel target = $region418
            $region423: #{tpu_custom_call.1} parent=415 // loop_exit
              _
          $region416: #{tpu_custom_call.1} parent=287 // pred_fallthru
            _
          // Predicated region
          $region435: #{tpu_custom_call.1} parent=287 // pred_check
            _
          $region436: #{tpu_custom_call.1} parent=287 // pred_check_branch
            %960 = sbr.rel (0) target = $region438
          $region437: #{tpu_custom_call.1} parent=287 // pred_region
            %961 = vsyncadd %s707, 16
          $region438: #{tpu_custom_call.1} parent=287 // pred_fallthru
            _
          %s962 = sadd.s32 0, 5
          %s963 = sadd.s32 %s699, %s962
          %s964 = sld [smem:[#allocation5 + %s963]]
          %s965 = sadd.s32 %s701, %s962
          %s966 = scalar_lea.vmem %s6, %s964
          %s967 = scalar_lea.vmem [#allocation2], %s965
          %p969 = scmp.lt.u32.totalorder 1, 8
          %p970 = pneg %p969
          // Predicated region
          $region439: #{tpu_custom_call.1} parent=287 // pred_check
            _
          $region440: #{tpu_custom_call.1} parent=287 // pred_check_branch
            %972 = sbr.rel (%p969) target = $region442
          $region441: #{tpu_custom_call.1} parent=287 // pred_region
            %s988 = sand.u32 1, 7
            %p989 = scmp.eq.s32.totalorder %s988, 0
            %p990 = pneg %p989
            // Predicated region
            $region454: #{tpu_custom_call.1} parent=441 // pred_check
              _
            $region455: #{tpu_custom_call.1} parent=441 // pred_check_branch
              %992 = sbr.rel (%p989) target = $region457
            $region456: #{tpu_custom_call.1} parent=441 // pred_region
              %s993 = sand.u32 1, 7
              %s994 = ssub.s32 1, %s993
              %s995 = scalar_lea.vmem %s966, %s994
              %s996 = ssub.s32 1, %s993
              %s997 = scalar_lea.vmem %s967, %s996 [#allocation2]
              %s998 = sshll.u32 1, %s993
              %s999 = ssub.s32 %s998, 1
              loop: start=0, step=1, limit=1
              $region458: #{tpu_custom_call.1} parent=456 // loop_pre_header
                _
              $region459: #{tpu_custom_call.1} parent=456 // loop_header
                %s1001 = sphi 0, %s1005
                %p1002 = scmp.ge.s32.totalorder %s1001, 1
                %s1006 = sphi %s995, %s995
                %s1007 = sphi %s997, %s997
              $region460: #{tpu_custom_call.1} parent=456 // loop_header_branch
                %1004 = sbr.rel (%p1002) target = $region464
              $region461: #{tpu_custom_call.1} parent=456 // loop_body
                %v1008 = vld [vmem:[%s1006] sm:%s999]
                %1009 = vst [vmem:[%s1007] sm:%s999] %v1008
              $region462: #{tpu_custom_call.1} parent=456 // loop_footer
                %s1005 = sadd.s32 1, %s1001
              $region463: #{tpu_custom_call.1} parent=456 // loop_footer_branch
                %1000 = sbr.rel target = $region459
              $region464: #{tpu_custom_call.1} parent=456 // loop_exit
                _
            $region457: #{tpu_custom_call.1} parent=441 // pred_fallthru
              _
          $region442: #{tpu_custom_call.1} parent=287 // pred_fallthru
            _
          // Predicated region
          $region443: #{tpu_custom_call.1} parent=287 // pred_check
            %p973 = pneg %p969
          $region444: #{tpu_custom_call.1} parent=287 // pred_check_branch
            %975 = sbr.rel (%p973) target = $region446
          $region445: #{tpu_custom_call.1} parent=287 // pred_region
            %s976 = sshll.u32 1, 1
            %s977 = ssub.s32 %s976, 1
            loop: start=0, step=1, limit=1
            $region447: #{tpu_custom_call.1} parent=445 // loop_pre_header
              _
            $region448: #{tpu_custom_call.1} parent=445 // loop_header
              %s979 = sphi 0, %s983
              %p980 = scmp.ge.s32.totalorder %s979, 1
              %s984 = sphi %s966, %s966
              %s985 = sphi %s967, %s967
            $region449: #{tpu_custom_call.1} parent=445 // loop_header_branch
              %982 = sbr.rel (%p980) target = $region453
            $region450: #{tpu_custom_call.1} parent=445 // loop_body
              %v986 = vld [vmem:[%s984] sm:%s977]
              %987 = vst [vmem:[%s985] sm:%s977] %v986
            $region451: #{tpu_custom_call.1} parent=445 // loop_footer
              %s983 = sadd.s32 1, %s979
            $region452: #{tpu_custom_call.1} parent=445 // loop_footer_branch
              %978 = sbr.rel target = $region448
            $region453: #{tpu_custom_call.1} parent=445 // loop_exit
              _
          $region446: #{tpu_custom_call.1} parent=287 // pred_fallthru
            _
          // Predicated region
          $region465: #{tpu_custom_call.1} parent=287 // pred_check
            _
          $region466: #{tpu_custom_call.1} parent=287 // pred_check_branch
            %1012 = sbr.rel (0) target = $region468
          $region467: #{tpu_custom_call.1} parent=287 // pred_region
            %1013 = vsyncadd %s707, 16
          $region468: #{tpu_custom_call.1} parent=287 // pred_fallthru
            _
          %s1014 = sadd.s32 0, 6
          %s1015 = sadd.s32 %s699, %s1014
          %s1016 = sld [smem:[#allocation5 + %s1015]]
          %s1017 = sadd.s32 %s701, %s1014
          %s1018 = scalar_lea.vmem %s6, %s1016
          %s1019 = scalar_lea.vmem [#allocation2], %s1017
          %p1021 = scmp.lt.u32.totalorder 1, 8
          %p1022 = pneg %p1021
          // Predicated region
          $region469: #{tpu_custom_call.1} parent=287 // pred_check
            _
          $region470: #{tpu_custom_call.1} parent=287 // pred_check_branch
            %1024 = sbr.rel (%p1021) target = $region472
          $region471: #{tpu_custom_call.1} parent=287 // pred_region
            %s1040 = sand.u32 1, 7
            %p1041 = scmp.eq.s32.totalorder %s1040, 0
            %p1042 = pneg %p1041
            // Predicated region
            $region484: #{tpu_custom_call.1} parent=471 // pred_check
              _
            $region485: #{tpu_custom_call.1} parent=471 // pred_check_branch
              %1044 = sbr.rel (%p1041) target = $region487
            $region486: #{tpu_custom_call.1} parent=471 // pred_region
              %s1045 = sand.u32 1, 7
              %s1046 = ssub.s32 1, %s1045
              %s1047 = scalar_lea.vmem %s1018, %s1046
              %s1048 = ssub.s32 1, %s1045
              %s1049 = scalar_lea.vmem %s1019, %s1048 [#allocation2]
              %s1050 = sshll.u32 1, %s1045
              %s1051 = ssub.s32 %s1050, 1
              loop: start=0, step=1, limit=1
              $region488: #{tpu_custom_call.1} parent=486 // loop_pre_header
                _
              $region489: #{tpu_custom_call.1} parent=486 // loop_header
                %s1053 = sphi 0, %s1057
                %p1054 = scmp.ge.s32.totalorder %s1053, 1
                %s1058 = sphi %s1047, %s1047
                %s1059 = sphi %s1049, %s1049
              $region490: #{tpu_custom_call.1} parent=486 // loop_header_branch
                %1056 = sbr.rel (%p1054) target = $region494
              $region491: #{tpu_custom_call.1} parent=486 // loop_body
                %v1060 = vld [vmem:[%s1058] sm:%s1051]
                %1061 = vst [vmem:[%s1059] sm:%s1051] %v1060
              $region492: #{tpu_custom_call.1} parent=486 // loop_footer
                %s1057 = sadd.s32 1, %s1053
              $region493: #{tpu_custom_call.1} parent=486 // loop_footer_branch
                %1052 = sbr.rel target = $region489
              $region494: #{tpu_custom_call.1} parent=486 // loop_exit
                _
            $region487: #{tpu_custom_call.1} parent=471 // pred_fallthru
              _
          $region472: #{tpu_custom_call.1} parent=287 // pred_fallthru
            _
          // Predicated region
          $region473: #{tpu_custom_call.1} parent=287 // pred_check
            %p1025 = pneg %p1021
          $region474: #{tpu_custom_call.1} parent=287 // pred_check_branch
            %1027 = sbr.rel (%p1025) target = $region476
          $region475: #{tpu_custom_call.1} parent=287 // pred_region
            %s1028 = sshll.u32 1, 1
            %s1029 = ssub.s32 %s1028, 1
            loop: start=0, step=1, limit=1
            $region477: #{tpu_custom_call.1} parent=475 // loop_pre_header
              _
            $region478: #{tpu_custom_call.1} parent=475 // loop_header
              %s1031 = sphi 0, %s1035
              %p1032 = scmp.ge.s32.totalorder %s1031, 1
              %s1036 = sphi %s1018, %s1018
              %s1037 = sphi %s1019, %s1019
            $region479: #{tpu_custom_call.1} parent=475 // loop_header_branch
              %1034 = sbr.rel (%p1032) target = $region483
            $region480: #{tpu_custom_call.1} parent=475 // loop_body
              %v1038 = vld [vmem:[%s1036] sm:%s1029]
              %1039 = vst [vmem:[%s1037] sm:%s1029] %v1038
            $region481: #{tpu_custom_call.1} parent=475 // loop_footer
              %s1035 = sadd.s32 1, %s1031
            $region482: #{tpu_custom_call.1} parent=475 // loop_footer_branch
              %1030 = sbr.rel target = $region478
            $region483: #{tpu_custom_call.1} parent=475 // loop_exit
              _
          $region476: #{tpu_custom_call.1} parent=287 // pred_fallthru
            _
          // Predicated region
          $region495: #{tpu_custom_call.1} parent=287 // pred_check
            _
          $region496: #{tpu_custom_call.1} parent=287 // pred_check_branch
            %1064 = sbr.rel (0) target = $region498
          $region497: #{tpu_custom_call.1} parent=287 // pred_region
            %1065 = vsyncadd %s707, 16
          $region498: #{tpu_custom_call.1} parent=287 // pred_fallthru
            _
          %s1066 = sadd.s32 0, 7
          %s1067 = sadd.s32 %s699, %s1066
          %s1068 = sld [smem:[#allocation5 + %s1067]]
          %s1069 = sadd.s32 %s701, %s1066
          %s1070 = scalar_lea.vmem %s6, %s1068
          %s1071 = scalar_lea.vmem [#allocation2], %s1069
          %p1073 = scmp.lt.u32.totalorder 1, 8
          %p1074 = pneg %p1073
          // Predicated region
          $region499: #{tpu_custom_call.1} parent=287 // pred_check
            _
          $region500: #{tpu_custom_call.1} parent=287 // pred_check_branch
            %1076 = sbr.rel (%p1073) target = $region502
          $region501: #{tpu_custom_call.1} parent=287 // pred_region
            %s1092 = sand.u32 1, 7
            %p1093 = scmp.eq.s32.totalorder %s1092, 0
            %p1094 = pneg %p1093
            // Predicated region
            $region514: #{tpu_custom_call.1} parent=501 // pred_check
              _
            $region515: #{tpu_custom_call.1} parent=501 // pred_check_branch
              %1096 = sbr.rel (%p1093) target = $region517
            $region516: #{tpu_custom_call.1} parent=501 // pred_region
              %s1097 = sand.u32 1, 7
              %s1098 = ssub.s32 1, %s1097
              %s1099 = scalar_lea.vmem %s1070, %s1098
              %s1100 = ssub.s32 1, %s1097
              %s1101 = scalar_lea.vmem %s1071, %s1100 [#allocation2]
              %s1102 = sshll.u32 1, %s1097
              %s1103 = ssub.s32 %s1102, 1
              loop: start=0, step=1, limit=1
              $region518: #{tpu_custom_call.1} parent=516 // loop_pre_header
                _
              $region519: #{tpu_custom_call.1} parent=516 // loop_header
                %s1105 = sphi 0, %s1109
                %p1106 = scmp.ge.s32.totalorder %s1105, 1
                %s1110 = sphi %s1099, %s1099
                %s1111 = sphi %s1101, %s1101
              $region520: #{tpu_custom_call.1} parent=516 // loop_header_branch
                %1108 = sbr.rel (%p1106) target = $region524
              $region521: #{tpu_custom_call.1} parent=516 // loop_body
                %v1112 = vld [vmem:[%s1110] sm:%s1103]
                %1113 = vst [vmem:[%s1111] sm:%s1103] %v1112
              $region522: #{tpu_custom_call.1} parent=516 // loop_footer
                %s1109 = sadd.s32 1, %s1105
              $region523: #{tpu_custom_call.1} parent=516 // loop_footer_branch
                %1104 = sbr.rel target = $region519
              $region524: #{tpu_custom_call.1} parent=516 // loop_exit
                _
            $region517: #{tpu_custom_call.1} parent=501 // pred_fallthru
              _
          $region502: #{tpu_custom_call.1} parent=287 // pred_fallthru
            _
          // Predicated region
          $region503: #{tpu_custom_call.1} parent=287 // pred_check
            %p1077 = pneg %p1073
          $region504: #{tpu_custom_call.1} parent=287 // pred_check_branch
            %1079 = sbr.rel (%p1077) target = $region506
          $region505: #{tpu_custom_call.1} parent=287 // pred_region
            %s1080 = sshll.u32 1, 1
            %s1081 = ssub.s32 %s1080, 1
            loop: start=0, step=1, limit=1
            $region507: #{tpu_custom_call.1} parent=505 // loop_pre_header
              _
            $region508: #{tpu_custom_call.1} parent=505 // loop_header
              %s1083 = sphi 0, %s1087
              %p1084 = scmp.ge.s32.totalorder %s1083, 1
              %s1088 = sphi %s1070, %s1070
              %s1089 = sphi %s1071, %s1071
            $region509: #{tpu_custom_call.1} parent=505 // loop_header_branch
              %1086 = sbr.rel (%p1084) target = $region513
            $region510: #{tpu_custom_call.1} parent=505 // loop_body
              %v1090 = vld [vmem:[%s1088] sm:%s1081]
              %1091 = vst [vmem:[%s1089] sm:%s1081] %v1090
            $region511: #{tpu_custom_call.1} parent=505 // loop_footer
              %s1087 = sadd.s32 1, %s1083
            $region512: #{tpu_custom_call.1} parent=505 // loop_footer_branch
              %1082 = sbr.rel target = $region508
            $region513: #{tpu_custom_call.1} parent=505 // loop_exit
              _
          $region506: #{tpu_custom_call.1} parent=287 // pred_fallthru
            _
          // Predicated region
          $region525: #{tpu_custom_call.1} parent=287 // pred_check
            _
          $region526: #{tpu_custom_call.1} parent=287 // pred_check_branch
            %1116 = sbr.rel (0) target = $region528
          $region527: #{tpu_custom_call.1} parent=287 // pred_region
            %1117 = vsyncadd %s707, 16
          $region528: #{tpu_custom_call.1} parent=287 // pred_fallthru
            _
        $region288: #{tpu_custom_call.1} parent=39 // pred_fallthru
          _
        %v1118 = vld [vmem:[%s262] sm:$0xff]
        %v1119 = vld [vmem:[%s269] sm:$0xff]
        %v1120 = vld [vmem:[%s3] sm:$0x3]
        %vm1121 = vcmp.eq.s32.totalorder %v1119, 0
        %v1122 = vsel %vm1121, 1, 0
        %v1123 = vcvt.s32.f32 %v1122
        %1125 = vset.pattern.permute.xlu0 0
        %1126 = vperm.xlu0 %1125, %v1123
        %v1127 = vpop.permute.xlu0 %1126
        %v1129 = vlaneseq
        %v1130 = vshrl.u32 %v1129, 7
        %v1131 = vsub.s32 0, %v1130
        %v1132 = vrot.slane %v1120, %v1131
        %v1133 = vmul.f32 %v1127, %v1132
        %v1134 = vadd.f32 %v1118, %v1133
        %vm1135 = vcmp.eq.s32.totalorder %v1119, 1
        %v1136 = vsel %vm1135, 1, 0
        %v1137 = vcvt.s32.f32 %v1136
        %1139 = vset.pattern.permute.xlu0 0
        %1140 = vperm.xlu0 %1139, %v1137
        %v1141 = vpop.permute.xlu0 %1140
        %v1143 = vlaneseq
        %v1144 = vshrl.u32 %v1143, 7
        %v1145 = vsub.s32 1, %v1144
        %v1146 = vrot.slane %v1120, %v1145
        %v1147 = vmul.f32 %v1141, %v1146
        %v1148 = vadd.f32 %v1134, %v1147
        %s1149 = smul.u32 %s272, 8
        %s1150 = scalar_lea.sflag [#allocation3], %s272
        %s1151 = smul.u32 8, 1
        %s1152 = sshll.u32 %s1151, 4
        %1153 = dma.done %s1150, %s1152
        %s1154 = scalar_lea.vmem [#allocation2], %s1149
        %v1155 = vld [vmem:[%s1154] sm:$0xff]
        %v1156 = vadd.f32 %v1155, %v1148
        %vm1157 = vcmask 261120
        %v1158 = vsel %vm1157, %v1156, 0.0
        %1159 = vadd.xlane.f32.xlu0 %v1158
        %v1160 = vpop.xlane.xlu0 %1159
        %v1161 = vrcp.pop 32.0
        %v1162 = vmul.f32 %v1160, %v1161
        %v1163 = vsub.f32 %v1156, %v1162
        %v1164 = vmul.f32 %v1163, %v1163
        %v1165 = vsel %vm1157, %v1164, 0.0
        %1166 = vadd.xlane.f32.xlu0 %v1165
        %v1167 = vpop.xlane.xlu0 %1166
        %v1168 = vmul.f32 %v1167, %v1161
        %v1169 = vadd.f32 %v1168, 1e-12
        %v1170 = vrsqrt.pop %v1169
        %v1171 = vmul.f32 %v1163, %v1170
        %v1172 = vld [vmem:[%s4] sm:$0x1]
        %v1174 = vlaneseq
        %v1175 = vshrl.u32 %v1174, 7
        %v1176 = vsub.s32 0, %v1175
        %v1177 = vrot.slane %v1172, %v1176
        %v1179 = vmul.f32 %v1171, %v1177
        %v1180 = vld [vmem:[%s5] sm:$0x1]
        %v1182 = vlaneseq
        %v1183 = vshrl.u32 %v1182, 7
        %v1184 = vsub.s32 0, %v1183
        %v1185 = vrot.slane %v1180, %v1184
        %v1187 = vadd.f32 %v1179, %v1185
        %1188 = vst.msk [vmem:[%s258] sm:$0xff] %vm1157, %v1187
        %s1189 = sand.u32 %s166, 1
        %s1190 = scalar_lea.sflag [#allocation7], %s1189
        %s1191 = sand.u32 %s166, 1
        %s1192 = smul.addr %s1191, 8
        %s1193 = scalar_lea.vmem [#allocation6], %s1192
        // Predicated region
        $region529: #{tpu_custom_call.1} parent=39 // pred_check
          %p1194 = pneg %p176
        $region530: #{tpu_custom_call.1} parent=39 // pred_check_branch
          %1196 = sbr.rel (%p1194) target = $region532
        $region531: #{tpu_custom_call.1} parent=39 // pred_region
          %s1198 = ssub.s32 128, 128
          %1199 = vsyncadd %s1190, %s1198
          %s1200 = sadd.s32 %s32, %s31
          %s1201 = smul.addr %s1200, 128
          %s1202 = scalar_lea.hbm %s7, %s1201
          %s1204 = sshll.u32 %s1193, 4
          %s1205 = int_to_ptr.vmem [resolvable:$true] %s1204
          %1207 = dma.vmem_to_hbm [thread:$0]  %s1205, 128, %s1202, %s1190
        $region532: #{tpu_custom_call.1} parent=39 // pred_fallthru
          _
      $region40: #{tpu_custom_call.1} parent=5 // pred_fallthru
        _
      %p1208 = scmp.le.s32.totalorder 2, %s22
      // Predicated region
      $region533: #{tpu_custom_call.1} parent=5 // pred_check
        %p1209 = pneg %p1208
      $region534: #{tpu_custom_call.1} parent=5 // pred_check_branch
        %1211 = sbr.rel (%p1209) target = $region536
      $region535: #{tpu_custom_call.1} parent=5 // pred_region
        %s1212 = ssub.s32 %s22, 2
        // Predicated region
        $region537: #{tpu_custom_call.1} parent=535 // pred_check
          %p1213 = pneg %p182
        $region538: #{tpu_custom_call.1} parent=535 // pred_check_branch
          %1215 = sbr.rel (%p1213) target = $region540
        $region539: #{tpu_custom_call.1} parent=535 // pred_region
          %s1216 = sand.u32 %s167, 1
          %s1217 = scalar_lea.sflag [#allocation7], %s1216
          %s1218 = sand.u32 %s167, 1
          %s1219 = smul.addr %s1218, 8
          %s1220 = scalar_lea.vmem [#allocation6], %s1219
          %1221 = dma.done %s1217, 128
        $region540: #{tpu_custom_call.1} parent=535 // pred_fallthru
          _
      $region536: #{tpu_custom_call.1} parent=5 // pred_fallthru
        _
    $region6: #{tpu_custom_call.1} parent=1 // loop_footer
      %s26 = sadd.s32 1, %s22
    $region7: #{tpu_custom_call.1} parent=1 // loop_footer_branch
      %21 = sbr.rel target = $region3
    $region8: #{tpu_custom_call.1} parent=1 // loop_exit
      _
    %1222 = vsyncpa [#allocation7], 1
    %s1223 = scalar_lea.sflag [#allocation7], 1
    %1224 = vsyncpa %s1223, 1
  %1225 = vsyncmov [#allocation3]
  %s1226 = vpop.sfrf %1225
  %p1227 = scmp.eq.s32.totalorder %s1226, 0
  %p1228 = pneg %p1227
  %1230 = shalt.err (%p1228)
  %s1231 = scalar_lea.sflag [#allocation3], 1
  %1232 = vsyncmov %s1231
  %s1233 = vpop.sfrf %1232
  %p1234 = scmp.eq.s32.totalorder %s1233, 0
  %p1235 = pneg %p1234
  %1237 = shalt.err (%p1235)

</llo_original>
